<compile_context>
chip_gen: v5e
topology: v5e:2x2
jax: 0.10.0
libtpu: 0.0.40
codegen_flags: <defaults>
</compile_context>

<pallas_src>
import jax
import jax.numpy as jnp
import numpy as np
from jax import lax
from jax.experimental import pallas as pl
from jax.experimental.pallas import tpu as pltpu

# ---- module constants (from clip_adapter_model_seg.__init__) ----------------
NUM_VIEWS = 10             # self.num_views
CHANNEL = 512              # self.channel (CLIP feature dim)
NUM_CLASSES = 16           # len(label_names)
ALPHA = 0.5                # AdapterModel(alpha=0.5)
HIDDEN = CHANNEL // 4      # standard CLIP-Adapter bottleneck
# TODO(synk): AdapterModel source not provided; using the standard CLIP-Adapter
# (Linear -> ReLU -> Linear -> ReLU, residual blend by alpha).

BLOCK_B = 8                # point clouds per grid block (8 | rows => aligned)
BATCH = 12                 # demo batch: exercises grid=2 and the padding path


def _adapter_seg_kernel(x_ref, w1_ref, b1_ref, w2_ref, b2_ref, vw_ref, pt_ref,
                        feat_ref, logit_ref):
    """One batch-block of BLOCK_B point clouds.

    x_ref:    (V*TB, C) f32 — view-major rows within the block (row v*TB + b).
    w1/w2:    (C, H) / (H, C) bf16 adapter weights; b1/b2 (1,H)/(1,C) f32.
    vw_ref:   (V*TB, 1) f32 softmax view weights, pre-broadcast column.
    pt_ref:   (C, NUM_CLASSES) f32 collapsed prompt (text_norm.T / sqrt(V)).
    feat_ref: (TB, C) f32;  logit_ref: (TB, NUM_CLASSES) f32.
    """
    tb = feat_ref.shape[0]

    x = x_ref[...]                                             # (V*TB, C) f32
    # Batched adapter MLP: one matmul pair for all views in the block
    # (bf16 MXU operands, f32 accumulation; elementwise math stays f32).
    h = jnp.dot(x.astype(jnp.bfloat16), w1_ref[...],
                preferred_element_type=jnp.float32)
    h = jnp.maximum(h + b1_ref[...], 0.0)                      # (V*TB, H)
    a = jnp.dot(h.astype(jnp.bfloat16), w2_ref[...],
                preferred_element_type=jnp.float32)
    a = jnp.maximum(a + b2_ref[...], 0.0)                      # (V*TB, C)
    y = ALPHA * a + (1.0 - ALPHA) * x                          # residual blend

    # L2 normalize (rsqrt on the EUP) and fold the softmax view weight into the
    # same (V*TB, 1) column -> one VPU broadcast multiply over (V*TB, C).
    inv_norm = lax.rsqrt(jnp.sum(y * y, axis=-1, keepdims=True) + 1e-12)
    ywv = y * (inv_norm * vw_ref[...])                         # (V*TB, C)

    # View pooling: sum the V sublane-aligned (TB, C) slabs.
    s = ywv[0:tb, :]
    for v in range(1, NUM_VIEWS):
        s = s + ywv[v * tb:(v + 1) * tb, :]

    feat_ref[...] = s * (1.0 / NUM_VIEWS)
    # Collapsed logits: (TB, C) @ (C, 16) entirely in f32 (tight logits).
    logit_ref[...] = 100.0 * jnp.dot(s, pt_ref[...],
                                     preferred_element_type=jnp.float32)


def prepare_params(w1, b1, w2, b2, w_views, text_features):
    """Per-model (frozen) parameter prep — done ONCE, outside the call path."""
    text_norm = text_features / jnp.linalg.norm(text_features, axis=-1,
                                                keepdims=True)
    return dict(
        w1=w1.astype(jnp.bfloat16),                            # (C, H)
        b1=b1.reshape(1, HIDDEN).astype(jnp.float32),          # (1, H)
        w2=w2.astype(jnp.bfloat16),                            # (H, C)
        b2=b2.reshape(1, CHANNEL).astype(jnp.float32),         # (1, C)
        # softmax view weights, pre-broadcast to the (V*TB, 1) row layout.
        vw_col=jnp.repeat(jax.nn.softmax(w_views.astype(jnp.float32)),
                          BLOCK_B)[:, None],
        # get_label_feature tiles text across views then L2-normalizes the
        # tiled vector; algebraically only text_norm.T / sqrt(V) is needed.
        prompt_col=(text_norm.T / np.sqrt(NUM_VIEWS)).astype(jnp.float32),
    )


@jax.jit
def clip_adapter_seg_forward(params, img_feats):
    """img_feats: (B*V, C) batch-major rows (b*num_views + v), as produced by
    encode_image.  Returns (features_2D (B, C), logits (B, NUM_CLASSES))."""
    bv, c = img_feats.shape
    b = bv // NUM_VIEWS
    nblk = pl.cdiv(b, BLOCK_B)
    b_pad = nblk * BLOCK_B

    x = img_feats.astype(jnp.float32)
    if b_pad != b:                                   # pad batch to block size
        x = jnp.pad(x, ((0, (b_pad - b) * NUM_VIEWS), (0, 0)))
    # batch-major -> (block, view, batch-in-block) row order so each grid block
    # is one contiguous, sublane-aligned (V*BLOCK_B, C) slab.
    x_blk = (x.reshape(nblk, BLOCK_B, NUM_VIEWS, c)
               .transpose(0, 2, 1, 3)
               .reshape(nblk * NUM_VIEWS * BLOCK_B, c))

    rows = NUM_VIEWS * BLOCK_B
    feats, logits = pl.pallas_call(
        _adapter_seg_kernel,
        out_shape=(jax.ShapeDtypeStruct((b_pad, CHANNEL), jnp.float32),
                   jax.ShapeDtypeStruct((b_pad, NUM_CLASSES), jnp.float32)),
        grid=(nblk,),
        in_specs=[
            pl.BlockSpec((rows, CHANNEL), lambda i: (i, 0)),        # x (streams)
            pl.BlockSpec((CHANNEL, HIDDEN), lambda i: (0, 0)),      # w1 resident
            pl.BlockSpec((1, HIDDEN), lambda i: (0, 0)),            # b1
            pl.BlockSpec((HIDDEN, CHANNEL), lambda i: (0, 0)),      # w2
            pl.BlockSpec((1, CHANNEL), lambda i: (0, 0)),           # b2
            pl.BlockSpec((rows, 1), lambda i: (0, 0)),              # view wts
            pl.BlockSpec((CHANNEL, NUM_CLASSES), lambda i: (0, 0)), # prompt
        ],
        out_specs=(pl.BlockSpec((BLOCK_B, CHANNEL), lambda i: (i, 0)),
                   pl.BlockSpec((BLOCK_B, NUM_CLASSES), lambda i: (i, 0))),
        compiler_params=pltpu.CompilerParams(
            dimension_semantics=("parallel",)),      # both TCs get blocks (v7x)
    )(x_blk, params["w1"], params["b1"], params["w2"], params["b2"],
      params["vw_col"], params["prompt_col"])

    return feats[:b], logits[:b]


def _reference(img_feats, w1, b1, w2, b2, w_views, text_features):
    """Pure-JAX f32 mirror of the PyTorch forward (post encode_image), using
    the module's explicit view-tiled, normalized prompt."""
    b = img_feats.shape[0] // NUM_VIEWS
    h = jnp.maximum(img_feats @ w1 + b1, 0.0)
    a = jnp.maximum(h @ w2 + b2, 0.0)
    y = ALPHA * a + (1.0 - ALPHA) * img_feats
    yn = y / jnp.linalg.norm(y, axis=-1, keepdims=True)
    vw = jax.nn.softmax(w_views)
    y3 = yn.reshape(b, NUM_VIEWS, CHANNEL) * vw.reshape(1, NUM_VIEWS, 1)
    features_2d = y3.mean(axis=1)
    flat = y3.reshape(b, NUM_VIEWS * CHANNEL)
    prompt = jnp.tile(text_features, (1, NUM_VIEWS))   # get_label_feature
    prompt = prompt / jnp.linalg.norm(prompt, axis=-1, keepdims=True)
    logits = 100.0 * flat @ prompt.T
    return features_2d, logits


if __name__ == "__main__":
    key = jax.random.PRNGKey(0)
    k_img, k_txt, k_w1, k_b1, k_w2, k_b2, k_vw = jax.random.split(key, 7)

    # Synthetic stand-ins for the frozen CLIP encoders / Realistic_Projection
    # renderer (untranslatable external sub-networks).
    img_feats = jax.random.normal(k_img, (BATCH * NUM_VIEWS, CHANNEL),
                                  dtype=jnp.float32)           # encode_image
    text_features = jax.random.normal(k_txt, (NUM_CLASSES, CHANNEL),
                                      dtype=jnp.float32)       # encode_text

    # Adapter parameters and DISTINCT per-view weights so the test actually
    # exercises the view <-> batch index mapping and the weighting path.
    w1 = 0.02 * jax.random.normal(k_w1, (CHANNEL, HIDDEN), dtype=jnp.float32)
    b1 = 0.01 * jax.random.normal(k_b1, (1, HIDDEN), dtype=jnp.float32)
    w2 = 0.02 * jax.random.normal(k_w2, (HIDDEN, CHANNEL), dtype=jnp.float32)
    b2 = 0.01 * jax.random.normal(k_b2, (1, CHANNEL), dtype=jnp.float32)
    w_views = jax.random.normal(k_vw, (NUM_VIEWS,), dtype=jnp.float32)

    params = prepare_params(w1, b1, w2, b2, w_views, text_features)  # hoisted

    feats, logits = clip_adapter_seg_forward(params, img_feats)
    jax.block_until_ready((feats, logits))

    ref_feats, ref_logits = _reference(img_feats, w1, b1, w2, b2,
                                       w_views, text_features)
    # Tolerances cover the bf16 adapter MXU operands (f32 accumulation) versus
    # the pure-f32 reference; the logits matmul itself is f32 in the kernel.
    np.testing.assert_allclose(np.asarray(feats), np.asarray(ref_feats),
                               rtol=3e-3, atol=3e-4)
    np.testing.assert_allclose(np.asarray(logits), np.asarray(ref_logits),
                               rtol=1e-2, atol=1e-2)

    print("KERNEL_OK")
</pallas_src>

<mosaic_0001>
module attributes {stable_mosaic.version = 11 : i64} {
  func.func @_adapter_seg_kernel(%arg0: i32, %arg1: memref<80x512xf32, #tpu.memory_space<vmem>>, %arg2: memref<512x128xbf16, #tpu.memory_space<vmem>>, %arg3: memref<1x128xf32, #tpu.memory_space<vmem>>, %arg4: memref<128x512xbf16, #tpu.memory_space<vmem>>, %arg5: memref<1x512xf32, #tpu.memory_space<vmem>>, %arg6: memref<80x1xf32, #tpu.memory_space<vmem>>, %arg7: memref<512x16xf32, #tpu.memory_space<vmem>>, %arg8: memref<8x512xf32, #tpu.memory_space<vmem>>, %arg9: memref<8x16xf32, #tpu.memory_space<vmem>>) attributes {dimension_semantics = [#tpu.dimension_semantics<parallel>], iteration_bounds = array<i64: 2>, scalar_prefetch = 0 : i64, scratch_operands = 0 : i64, tpu.core_type = #tpu.core_type<tc>, window_params = [{transform_indices = @transform_0, window_bounds = array<i64: 80, 512>}, {pipeline_mode = #tpu.pipeline_mode<synchronous>, transform_indices = @transform_1, window_bounds = array<i64: 512, 128>}, {pipeline_mode = #tpu.pipeline_mode<synchronous>, transform_indices = @transform_2, window_bounds = array<i64: 1, 128>}, {pipeline_mode = #tpu.pipeline_mode<synchronous>, transform_indices = @transform_3, window_bounds = array<i64: 128, 512>}, {pipeline_mode = #tpu.pipeline_mode<synchronous>, transform_indices = @transform_4, window_bounds = array<i64: 1, 512>}, {pipeline_mode = #tpu.pipeline_mode<synchronous>, transform_indices = @transform_5, window_bounds = array<i64: 80, 1>}, {pipeline_mode = #tpu.pipeline_mode<synchronous>, transform_indices = @transform_6, window_bounds = array<i64: 512, 16>}, {transform_indices = @transform_7, window_bounds = array<i64: 8, 512>}, {transform_indices = @transform_8, window_bounds = array<i64: 8, 16>}]} {
    %c0 = arith.constant 0 : index
    %c0_0 = arith.constant 0 : index
    %0 = vector.load %arg1[%c0, %c0_0] : memref<80x512xf32, #tpu.memory_space<vmem>>, vector<80x512xf32>
    %1 = arith.truncf %0 : vector<80x512xf32> to vector<80x512xbf16>
    %c0_1 = arith.constant 0 : index
    %c0_2 = arith.constant 0 : index
    %2 = vector.load %arg2[%c0_1, %c0_2] : memref<512x128xbf16, #tpu.memory_space<vmem>>, vector<512x128xbf16>
    %cst = arith.constant dense<0.000000e+00> : vector<80x128xf32>
    %3 = tpu.matmul %1, %2, %cst {dimension_numbers = #tpu.dot_dimension_numbers<[1], [0], [0], [1], [0, 0, 1, 1], [], []>} : vector<80x512xbf16>, vector<512x128xbf16>, vector<80x128xf32> -> vector<80x128xf32>
    %c0_3 = arith.constant 0 : index
    %c0_4 = arith.constant 0 : index
    %4 = vector.load %arg3[%c0_3, %c0_4] : memref<1x128xf32, #tpu.memory_space<vmem>>, vector<1x128xf32>
    %5 = vector.broadcast %4 : vector<1x128xf32> to vector<80x128xf32>
    %6 = arith.addf %3, %5 : vector<80x128xf32>
    %cst_5 = arith.constant 0.000000e+00 : f32
    %7 = vector.broadcast %cst_5 : f32 to vector<80x128xf32>
    %8 = arith.maximumf %6, %7 : vector<80x128xf32>
    %9 = arith.truncf %8 : vector<80x128xf32> to vector<80x128xbf16>
    %c0_6 = arith.constant 0 : index
    %c0_7 = arith.constant 0 : index
    %10 = vector.load %arg4[%c0_6, %c0_7] : memref<128x512xbf16, #tpu.memory_space<vmem>>, vector<128x512xbf16>
    %cst_8 = arith.constant dense<0.000000e+00> : vector<80x512xf32>
    %11 = tpu.matmul %9, %10, %cst_8 {dimension_numbers = #tpu.dot_dimension_numbers<[1], [0], [0], [1], [0, 0, 1, 1], [], []>} : vector<80x128xbf16>, vector<128x512xbf16>, vector<80x512xf32> -> vector<80x512xf32>
    %c0_9 = arith.constant 0 : index
    %c0_10 = arith.constant 0 : index
    %12 = vector.load %arg5[%c0_9, %c0_10] : memref<1x512xf32, #tpu.memory_space<vmem>>, vector<1x512xf32>
    %13 = vector.broadcast %12 : vector<1x512xf32> to vector<80x512xf32>
    %14 = arith.addf %11, %13 : vector<80x512xf32>
    %cst_11 = arith.constant 0.000000e+00 : f32
    %15 = vector.broadcast %cst_11 : f32 to vector<80x512xf32>
    %16 = arith.maximumf %14, %15 : vector<80x512xf32>
    %cst_12 = arith.constant 5.000000e-01 : f32
    %17 = vector.broadcast %cst_12 : f32 to vector<80x512xf32>
    %18 = arith.mulf %17, %16 : vector<80x512xf32>
    %cst_13 = arith.constant 5.000000e-01 : f32
    %19 = vector.broadcast %cst_13 : f32 to vector<80x512xf32>
    %20 = arith.mulf %19, %0 : vector<80x512xf32>
    %21 = arith.addf %18, %20 : vector<80x512xf32>
    %22 = arith.mulf %21, %21 : vector<80x512xf32>
    %cst_14 = arith.constant dense<0.000000e+00> : vector<80xf32>
    %23 = vector.multi_reduction <add>, %22, %cst_14 [1] : vector<80x512xf32> to vector<80xf32>
    %24 = vector.shape_cast %23 : vector<80xf32> to vector<80x1xf32>
    %cst_15 = arith.constant 9.99999996E-13 : f32
    %25 = vector.broadcast %cst_15 : f32 to vector<80x1xf32>
    %26 = arith.addf %24, %25 : vector<80x1xf32>
    %27 = math.rsqrt %26 : vector<80x1xf32>
    %c0_16 = arith.constant 0 : index
    %c0_17 = arith.constant 0 : index
    %28 = vector.load %arg6[%c0_16, %c0_17] : memref<80x1xf32, #tpu.memory_space<vmem>>, vector<80x1xf32>
    %29 = arith.mulf %27, %28 : vector<80x1xf32>
    %30 = vector.broadcast %29 : vector<80x1xf32> to vector<80x512xf32>
    %31 = arith.mulf %21, %30 : vector<80x512xf32>
    %32 = vector.extract_strided_slice %31 {offsets = [0, 0], sizes = [8, 512], strides = [1, 1]} : vector<80x512xf32> to vector<8x512xf32>
    %33 = vector.extract_strided_slice %31 {offsets = [8, 0], sizes = [8, 512], strides = [1, 1]} : vector<80x512xf32> to vector<8x512xf32>
    %34 = arith.addf %32, %33 : vector<8x512xf32>
    %35 = vector.extract_strided_slice %31 {offsets = [16, 0], sizes = [8, 512], strides = [1, 1]} : vector<80x512xf32> to vector<8x512xf32>
    %36 = arith.addf %34, %35 : vector<8x512xf32>
    %37 = vector.extract_strided_slice %31 {offsets = [24, 0], sizes = [8, 512], strides = [1, 1]} : vector<80x512xf32> to vector<8x512xf32>
    %38 = arith.addf %36, %37 : vector<8x512xf32>
    %39 = vector.extract_strided_slice %31 {offsets = [32, 0], sizes = [8, 512], strides = [1, 1]} : vector<80x512xf32> to vector<8x512xf32>
    %40 = arith.addf %38, %39 : vector<8x512xf32>
    %41 = vector.extract_strided_slice %31 {offsets = [40, 0], sizes = [8, 512], strides = [1, 1]} : vector<80x512xf32> to vector<8x512xf32>
    %42 = arith.addf %40, %41 : vector<8x512xf32>
    %43 = vector.extract_strided_slice %31 {offsets = [48, 0], sizes = [8, 512], strides = [1, 1]} : vector<80x512xf32> to vector<8x512xf32>
    %44 = arith.addf %42, %43 : vector<8x512xf32>
    %45 = vector.extract_strided_slice %31 {offsets = [56, 0], sizes = [8, 512], strides = [1, 1]} : vector<80x512xf32> to vector<8x512xf32>
    %46 = arith.addf %44, %45 : vector<8x512xf32>
    %47 = vector.extract_strided_slice %31 {offsets = [64, 0], sizes = [8, 512], strides = [1, 1]} : vector<80x512xf32> to vector<8x512xf32>
    %48 = arith.addf %46, %47 : vector<8x512xf32>
    %49 = vector.extract_strided_slice %31 {offsets = [72, 0], sizes = [8, 512], strides = [1, 1]} : vector<80x512xf32> to vector<8x512xf32>
    %50 = arith.addf %48, %49 : vector<8x512xf32>
    %cst_18 = arith.constant 1.000000e-01 : f32
    %51 = vector.broadcast %cst_18 : f32 to vector<8x512xf32>
    %52 = arith.mulf %50, %51 : vector<8x512xf32>
    %c0_19 = arith.constant 0 : index
    %c0_20 = arith.constant 0 : index
    %53 = vector.load %arg8[%c0_19, %c0_20] : memref<8x512xf32, #tpu.memory_space<vmem>>, vector<8x512xf32>
    tpu.vector_store %arg8[%c0_19, %c0_20], %52 {strides = array<i32>} : memref<8x512xf32, #tpu.memory_space<vmem>>, vector<8x512xf32>,
    %c0_21 = arith.constant 0 : index
    %c0_22 = arith.constant 0 : index
    %54 = vector.load %arg7[%c0_21, %c0_22] : memref<512x16xf32, #tpu.memory_space<vmem>>, vector<512x16xf32>
    %cst_23 = arith.constant dense<0.000000e+00> : vector<8x16xf32>
    %55 = tpu.matmul %50, %54, %cst_23 {dimension_numbers = #tpu.dot_dimension_numbers<[1], [0], [0], [1], [0, 0, 1, 1], [], []>} : vector<8x512xf32>, vector<512x16xf32>, vector<8x16xf32> -> vector<8x16xf32>
    %cst_24 = arith.constant 1.000000e+02 : f32
    %56 = vector.broadcast %cst_24 : f32 to vector<8x16xf32>
    %57 = arith.mulf %56, %55 : vector<8x16xf32>
    %c0_25 = arith.constant 0 : index
    %c0_26 = arith.constant 0 : index
    %58 = vector.load %arg9[%c0_25, %c0_26] : memref<8x16xf32, #tpu.memory_space<vmem>>, vector<8x16xf32>
    tpu.vector_store %arg9[%c0_25, %c0_26], %57 {strides = array<i32>} : memref<8x16xf32, #tpu.memory_space<vmem>>, vector<8x16xf32>,
    return
  }
  func.func @transform_0(%arg0: i32) -> (i32, i32) {
    %c0_i32 = arith.constant 0 : i32
    %c0_i32_0 = arith.constant 0 : i32
    return %arg0, %c0_i32 : i32, i32
  }
  func.func @transform_1(%arg0: i32) -> (i32, i32) {
    %c0_i32 = arith.constant 0 : i32
    %c0_i32_0 = arith.constant 0 : i32
    %c0_i32_1 = arith.constant 0 : i32
    return %c0_i32, %c0_i32_0 : i32, i32
  }
  func.func @transform_2(%arg0: i32) -> (i32, i32) {
    %c0_i32 = arith.constant 0 : i32
    %c0_i32_0 = arith.constant 0 : i32
    %c0_i32_1 = arith.constant 0 : i32
    return %c0_i32, %c0_i32_0 : i32, i32
  }
  func.func @transform_3(%arg0: i32) -> (i32, i32) {
    %c0_i32 = arith.constant 0 : i32
    %c0_i32_0 = arith.constant 0 : i32
    %c0_i32_1 = arith.constant 0 : i32
    return %c0_i32, %c0_i32_0 : i32, i32
  }
  func.func @transform_4(%arg0: i32) -> (i32, i32) {
    %c0_i32 = arith.constant 0 : i32
    %c0_i32_0 = arith.constant 0 : i32
    %c0_i32_1 = arith.constant 0 : i32
    return %c0_i32, %c0_i32_0 : i32, i32
  }
  func.func @transform_5(%arg0: i32) -> (i32, i32) {
    %c0_i32 = arith.constant 0 : i32
    %c0_i32_0 = arith.constant 0 : i32
    %c0_i32_1 = arith.constant 0 : i32
    return %c0_i32, %c0_i32_0 : i32, i32
  }
  func.func @transform_6(%arg0: i32) -> (i32, i32) {
    %c0_i32 = arith.constant 0 : i32
    %c0_i32_0 = arith.constant 0 : i32
    %c0_i32_1 = arith.constant 0 : i32
    return %c0_i32, %c0_i32_0 : i32, i32
  }
  func.func @transform_7(%arg0: i32) -> (i32, i32) {
    %c0_i32 = arith.constant 0 : i32
    %c0_i32_0 = arith.constant 0 : i32
    return %arg0, %c0_i32 : i32, i32
  }
  func.func @transform_8(%arg0: i32) -> (i32, i32) {
    %c0_i32 = arith.constant 0 : i32
    %c0_i32_0 = arith.constant 0 : i32
    return %arg0, %c0_i32 : i32, i32
  }
}

</mosaic_0001>

<llo_original>
// kernel: clip_adapter_seg_forward.1
$region0: #{clip_adapter_seg_forward.1}
  #allocation0 [shape = 'u32[]', space=smem, size = 0x4, offset = 0x4, fixed_abs, tag = 'smem constant byte address 0x4 - core index']
  #allocation1 [shape = 'u32[72,128]{1,0:T(1,128)}', space=vmem, size = 0x9000, scoped, tag = 'internal scratch']
  %s0 = inlined_call_operand.vmem [shape: f32[160,512], index: 0, kind: input, shape index: {}]
  %s1 = inlined_call_operand.vmem [shape: bf16[512,128], index: 1, kind: input, shape index: {}]
  %s2 = inlined_call_operand.vmem [shape: f32[1,128], index: 2, kind: input, shape index: {}]
  %s3 = inlined_call_operand.vmem [shape: bf16[128,512], index: 3, kind: input, shape index: {}]
  %s4 = inlined_call_operand.vmem [shape: f32[1,512], index: 4, kind: input, shape index: {}]
  %s5 = inlined_call_operand.vmem [shape: f32[80,1], index: 5, kind: input, shape index: {}]
  %s6 = inlined_call_operand.vmem [shape: f32[512,16], index: 6, kind: input, shape index: {}]
  %s7 = inlined_call_operand.hbm [shape: f32[16,512], index: 7, kind: output, shape index: {0}]
  %s8 = inlined_call_operand.hbm [shape: f32[16,16], index: 8, kind: output, shape index: {1}]
  %9 = xla_tuple %s7, %s8
  %s10 = sld [smem:[#allocation0]]
  $region69: #{clip_adapter_seg_forward.1} parent=0
    _
  %s12 = ssub.s32 1, %s10
  %s13 = scalar_select 0, %s12, %s10
  $region1: #{clip_adapter_seg_forward.1} parent=0
    #allocation2 [shape = 'u8[32768]{0}', space=vmem, size = 0x8000, scoped, tag = 'output window, operand 0']
    #allocation3 [shape = 's32[2]{0}', space=sflag, size = 0x8, scoped, tag = 'scoped memory for clip_adapter_seg_forward.1']
    #allocation4 [shape = 'u8[8192]{0}', space=vmem, size = 0x2000, scoped, tag = 'output window, operand 1']
    #allocation5 [shape = 's32[2]{0}', space=sflag, size = 0x8, scoped, tag = 'scoped memory for clip_adapter_seg_forward.1']
    %14 = vsyncpa [#allocation3], 0
    %s15 = scalar_lea.sflag [#allocation3], 1
    %16 = vsyncpa %s15, 0
    %17 = vsyncpa [#allocation5], 0
    %s18 = scalar_lea.sflag [#allocation5], 1
    %19 = vsyncpa %s18, 0
    loop: start=0, step=1, limit=4
    $region2: #{clip_adapter_seg_forward.1} parent=1 // loop_pre_header
      _
    $region3: #{clip_adapter_seg_forward.1} parent=1 // loop_header
      %s21 = sphi 0, %s25
      %p22 = scmp.ge.s32.totalorder %s21, 4
      %s31 = sphi 0, %s33
      %s34 = sphi 0, %s31
      %s35 = sphi 0, %s34
      %s51 = sphi 0, %s35
      %s55 = sphi 0, %s55
      %s57 = sphi 0, %s55
      %s58 = sphi 0, %s57
      %s72 = sphi 0, %s58
      %s76 = sphi 0, %s76
      %s78 = sphi 0, %s76
      %s79 = sphi 0, %s78
      %s93 = sphi 0, %s79
      %s97 = sphi 0, %s97
      %s99 = sphi 0, %s97
      %s100 = sphi 0, %s99
      %s114 = sphi 0, %s100
      %s118 = sphi 0, %s118
      %s120 = sphi 0, %s118
      %s121 = sphi 0, %s120
      %s135 = sphi 0, %s121
      %s139 = sphi 0, %s139
      %s141 = sphi 0, %s139
      %s142 = sphi 0, %s141
      %s156 = sphi 0, %s142
      %s160 = sphi 0, %s160
      %s162 = sphi 0, %s160
      %s163 = sphi 0, %s162
      %s177 = sphi 0, %s163
      %s183 = sphi 0, %s185
      %s186 = sphi 0, %s183
      %s187 = sphi 0, %s186
      %s203 = sphi 0, %s187
      %s209 = sphi 0, %s211
      %s212 = sphi 0, %s209
      %s213 = sphi 0, %s212
      %s229 = sphi 0, %s213
    $region4: #{clip_adapter_seg_forward.1} parent=1 // loop_header_branch
      %24 = sbr.rel (%p22) target = $region8
    $region5: #{clip_adapter_seg_forward.1} parent=1 // loop_body
      %s26 = ssub.s32 %s21, 1
      %s27 = ssub.s32 %s21, 2
      %s28 = sadd.s32 %s21, 1
      %s29 = ssub.s32 %s21, %s28
      %p30 = scmp.eq.s32.totalorder %s29, 0
      %s32 = sadd.s32 %s31, 1
      %s33 = scalar_select %p30, %s31, %s32
      %p36 = pneg %p30
      %p37 = scmp.eq.s32.totalorder %s21, 1
      %p38 = por %p36, %p37
      %p39 = scmp.ne.s32.totalorder %s31, %s34
      %p40 = scmp.eq.s32.totalorder %s21, 0
      %p41 = por %p39, %p40
      %p42 = scmp.ne.s32.totalorder %s31, %s34
      %p43 = scmp.eq.s32.totalorder %s26, 1
      %p44 = por %p42, %p43
      %p45 = scmp.ne.s32.totalorder %s34, %s35
      %p46 = scmp.eq.s32.totalorder %s26, 0
      %p47 = por %p45, %p46
      %p48 = scmp.ne.s32.totalorder %s34, %s35
      %p49 = scmp.eq.s32.totalorder %s27, 1
      %p50 = por %p48, %p49
      %p52 = scmp.ne.s32.totalorder %s35, %s51
      %p53 = scmp.eq.s32.totalorder %s27, 0
      %p54 = por %p52, %p53
      %s56 = sadd.s32 %s55, 1
      %p59 = scmp.eq.s32.totalorder %s21, 1
      %p60 = scmp.ne.s32.totalorder %s55, %s57
      %p61 = scmp.eq.s32.totalorder %s21, 0
      %p62 = por %p60, %p61
      %p63 = scmp.ne.s32.totalorder %s55, %s57
      %p64 = scmp.eq.s32.totalorder %s26, 1
      %p65 = por %p63, %p64
      %p66 = scmp.ne.s32.totalorder %s57, %s58
      %p67 = scmp.eq.s32.totalorder %s26, 0
      %p68 = por %p66, %p67
      %p69 = scmp.ne.s32.totalorder %s57, %s58
      %p70 = scmp.eq.s32.totalorder %s27, 1
      %p71 = por %p69, %p70
      %p73 = scmp.ne.s32.totalorder %s58, %s72
      %p74 = scmp.eq.s32.totalorder %s27, 0
      %p75 = por %p73, %p74
      %s77 = sadd.s32 %s76, 1
      %p80 = scmp.eq.s32.totalorder %s21, 1
      %p81 = scmp.ne.s32.totalorder %s76, %s78
      %p82 = scmp.eq.s32.totalorder %s21, 0
      %p83 = por %p81, %p82
      %p84 = scmp.ne.s32.totalorder %s76, %s78
      %p85 = scmp.eq.s32.totalorder %s26, 1
      %p86 = por %p84, %p85
      %p87 = scmp.ne.s32.totalorder %s78, %s79
      %p88 = scmp.eq.s32.totalorder %s26, 0
      %p89 = por %p87, %p88
      %p90 = scmp.ne.s32.totalorder %s78, %s79
      %p91 = scmp.eq.s32.totalorder %s27, 1
      %p92 = por %p90, %p91
      %p94 = scmp.ne.s32.totalorder %s79, %s93
      %p95 = scmp.eq.s32.totalorder %s27, 0
      %p96 = por %p94, %p95
      %s98 = sadd.s32 %s97, 1
      %p101 = scmp.eq.s32.totalorder %s21, 1
      %p102 = scmp.ne.s32.totalorder %s97, %s99
      %p103 = scmp.eq.s32.totalorder %s21, 0
      %p104 = por %p102, %p103
      %p105 = scmp.ne.s32.totalorder %s97, %s99
      %p106 = scmp.eq.s32.totalorder %s26, 1
      %p107 = por %p105, %p106
      %p108 = scmp.ne.s32.totalorder %s99, %s100
      %p109 = scmp.eq.s32.totalorder %s26, 0
      %p110 = por %p108, %p109
      %p111 = scmp.ne.s32.totalorder %s99, %s100
      %p112 = scmp.eq.s32.totalorder %s27, 1
      %p113 = por %p111, %p112
      %p115 = scmp.ne.s32.totalorder %s100, %s114
      %p116 = scmp.eq.s32.totalorder %s27, 0
      %p117 = por %p115, %p116
      %s119 = sadd.s32 %s118, 1
      %p122 = scmp.eq.s32.totalorder %s21, 1
      %p123 = scmp.ne.s32.totalorder %s118, %s120
      %p124 = scmp.eq.s32.totalorder %s21, 0
      %p125 = por %p123, %p124
      %p126 = scmp.ne.s32.totalorder %s118, %s120
      %p127 = scmp.eq.s32.totalorder %s26, 1
      %p128 = por %p126, %p127
      %p129 = scmp.ne.s32.totalorder %s120, %s121
      %p130 = scmp.eq.s32.totalorder %s26, 0
      %p131 = por %p129, %p130
      %p132 = scmp.ne.s32.totalorder %s120, %s121
      %p133 = scmp.eq.s32.totalorder %s27, 1
      %p134 = por %p132, %p133
      %p136 = scmp.ne.s32.totalorder %s121, %s135
      %p137 = scmp.eq.s32.totalorder %s27, 0
      %p138 = por %p136, %p137
      %s140 = sadd.s32 %s139, 1
      %p143 = scmp.eq.s32.totalorder %s21, 1
      %p144 = scmp.ne.s32.totalorder %s139, %s141
      %p145 = scmp.eq.s32.totalorder %s21, 0
      %p146 = por %p144, %p145
      %p147 = scmp.ne.s32.totalorder %s139, %s141
      %p148 = scmp.eq.s32.totalorder %s26, 1
      %p149 = por %p147, %p148
      %p150 = scmp.ne.s32.totalorder %s141, %s142
      %p151 = scmp.eq.s32.totalorder %s26, 0
      %p152 = por %p150, %p151
      %p153 = scmp.ne.s32.totalorder %s141, %s142
      %p154 = scmp.eq.s32.totalorder %s27, 1
      %p155 = por %p153, %p154
      %p157 = scmp.ne.s32.totalorder %s142, %s156
      %p158 = scmp.eq.s32.totalorder %s27, 0
      %p159 = por %p157, %p158
      %s161 = sadd.s32 %s160, 1
      %p164 = scmp.eq.s32.totalorder %s21, 1
      %p165 = scmp.ne.s32.totalorder %s160, %s162
      %p166 = scmp.eq.s32.totalorder %s21, 0
      %p167 = por %p165, %p166
      %p168 = scmp.ne.s32.totalorder %s160, %s162
      %p169 = scmp.eq.s32.totalorder %s26, 1
      %p170 = por %p168, %p169
      %p171 = scmp.ne.s32.totalorder %s162, %s163
      %p172 = scmp.eq.s32.totalorder %s26, 0
      %p173 = por %p171, %p172
      %p174 = scmp.ne.s32.totalorder %s162, %s163
      %p175 = scmp.eq.s32.totalorder %s27, 1
      %p176 = por %p174, %p175
      %p178 = scmp.ne.s32.totalorder %s163, %s177
      %p179 = scmp.eq.s32.totalorder %s27, 0
      %p180 = por %p178, %p179
      %s181 = ssub.s32 %s21, %s28
      %p182 = scmp.eq.s32.totalorder %s181, 0
      %s184 = sadd.s32 %s183, 1
      %s185 = scalar_select %p182, %s183, %s184
      %p188 = pneg %p182
      %p189 = scmp.eq.s32.totalorder %s21, 1
      %p190 = por %p188, %p189
      %p191 = scmp.ne.s32.totalorder %s183, %s186
      %p192 = scmp.eq.s32.totalorder %s21, 0
      %p193 = por %p191, %p192
      %p194 = scmp.ne.s32.totalorder %s183, %s186
      %p195 = scmp.eq.s32.totalorder %s26, 1
      %p196 = por %p194, %p195
      %p197 = scmp.ne.s32.totalorder %s186, %s187
      %p198 = scmp.eq.s32.totalorder %s26, 0
      %p199 = por %p197, %p198
      %p200 = scmp.ne.s32.totalorder %s186, %s187
      %p201 = scmp.eq.s32.totalorder %s27, 1
      %p202 = por %p200, %p201
      %p204 = scmp.ne.s32.totalorder %s187, %s203
      %p205 = scmp.eq.s32.totalorder %s27, 0
      %p206 = por %p204, %p205
      %s207 = ssub.s32 %s21, %s28
      %p208 = scmp.eq.s32.totalorder %s207, 0
      %s210 = sadd.s32 %s209, 1
      %s211 = scalar_select %p208, %s209, %s210
      %p214 = pneg %p208
      %p215 = scmp.eq.s32.totalorder %s21, 1
      %p216 = por %p214, %p215
      %p217 = scmp.ne.s32.totalorder %s209, %s212
      %p218 = scmp.eq.s32.totalorder %s21, 0
      %p219 = por %p217, %p218
      %p220 = scmp.ne.s32.totalorder %s209, %s212
      %p221 = scmp.eq.s32.totalorder %s26, 1
      %p222 = por %p220, %p221
      %p223 = scmp.ne.s32.totalorder %s212, %s213
      %p224 = scmp.eq.s32.totalorder %s26, 0
      %p225 = por %p223, %p224
      %p226 = scmp.ne.s32.totalorder %s212, %s213
      %p227 = scmp.eq.s32.totalorder %s27, 1
      %p228 = por %p226, %p227
      %p230 = scmp.ne.s32.totalorder %s213, %s229
      %p231 = scmp.eq.s32.totalorder %s27, 0
      %p232 = por %p230, %p231
      %p233 = scmp.le.s32.totalorder 1, %s21
      %p234 = scmp.lt.s32.totalorder %s21, 3
      %p235 = pnand %p233, %p234
      %p236 = pneg %p235
      // Predicated region
      $region9: #{clip_adapter_seg_forward.1} parent=5 // pred_check
        _
      $region10: #{clip_adapter_seg_forward.1} parent=5 // pred_check_branch
        %238 = sbr.rel (%p235) target = $region12
      $region11: #{clip_adapter_seg_forward.1} parent=5 // pred_region
        %s239 = ssub.s32 %s21, 1
        // Predicated region
        $region13: #{clip_adapter_seg_forward.1} parent=11 // pred_check
          %p240 = pneg %p68
        $region14: #{clip_adapter_seg_forward.1} parent=11 // pred_check_branch
          %242 = sbr.rel (%p240) target = $region16
        $region15: #{clip_adapter_seg_forward.1} parent=11 // pred_region
          _
        $region16: #{clip_adapter_seg_forward.1} parent=11 // pred_fallthru
          _
        // Predicated region
        $region17: #{clip_adapter_seg_forward.1} parent=11 // pred_check
          %p243 = pneg %p89
        $region18: #{clip_adapter_seg_forward.1} parent=11 // pred_check_branch
          %245 = sbr.rel (%p243) target = $region20
        $region19: #{clip_adapter_seg_forward.1} parent=11 // pred_region
          _
        $region20: #{clip_adapter_seg_forward.1} parent=11 // pred_fallthru
          _
        // Predicated region
        $region21: #{clip_adapter_seg_forward.1} parent=11 // pred_check
          %p246 = pneg %p110
        $region22: #{clip_adapter_seg_forward.1} parent=11 // pred_check_branch
          %248 = sbr.rel (%p246) target = $region24
        $region23: #{clip_adapter_seg_forward.1} parent=11 // pred_region
          _
        $region24: #{clip_adapter_seg_forward.1} parent=11 // pred_fallthru
          _
        // Predicated region
        $region25: #{clip_adapter_seg_forward.1} parent=11 // pred_check
          %p249 = pneg %p131
        $region26: #{clip_adapter_seg_forward.1} parent=11 // pred_check_branch
          %251 = sbr.rel (%p249) target = $region28
        $region27: #{clip_adapter_seg_forward.1} parent=11 // pred_region
          _
        $region28: #{clip_adapter_seg_forward.1} parent=11 // pred_fallthru
          _
        // Predicated region
        $region29: #{clip_adapter_seg_forward.1} parent=11 // pred_check
          %p252 = pneg %p152
        $region30: #{clip_adapter_seg_forward.1} parent=11 // pred_check_branch
          %254 = sbr.rel (%p252) target = $region32
        $region31: #{clip_adapter_seg_forward.1} parent=11 // pred_region
          _
        $region32: #{clip_adapter_seg_forward.1} parent=11 // pred_fallthru
          _
        // Predicated region
        $region33: #{clip_adapter_seg_forward.1} parent=11 // pred_check
          %p255 = pneg %p173
        $region34: #{clip_adapter_seg_forward.1} parent=11 // pred_check_branch
          %257 = sbr.rel (%p255) target = $region36
        $region35: #{clip_adapter_seg_forward.1} parent=11 // pred_region
          _
        $region36: #{clip_adapter_seg_forward.1} parent=11 // pred_fallthru
          _
      $region12: #{clip_adapter_seg_forward.1} parent=5 // pred_fallthru
        _
      %p258 = scmp.lt.s32.totalorder %s21, 2
      // Predicated region
      $region37: #{clip_adapter_seg_forward.1} parent=5 // pred_check
        %p259 = pneg %p258
      $region38: #{clip_adapter_seg_forward.1} parent=5 // pred_check_branch
        %261 = sbr.rel (%p259) target = $region40
      $region39: #{clip_adapter_seg_forward.1} parent=5 // pred_region
        // Predicated region
        $region41: #{clip_adapter_seg_forward.1} parent=39 // pred_check
          %p262 = pneg %p41
        $region42: #{clip_adapter_seg_forward.1} parent=39 // pred_check_branch
          %264 = sbr.rel (%p262) target = $region44
        $region43: #{clip_adapter_seg_forward.1} parent=39 // pred_region
          %s265 = smul.u32 10, %s21
          %p266 = scmp.lt.s32.totalorder %s265, 19
          %s267 = scalar_select %p266, %s265, 19
          %s268 = smul.addr %s267, 4
          %s269 = smul.addr %s268, 8
          %s270 = scalar_lea.vmem %s0, %s269
          %s271 = smul.u32 10, %s21
        $region44: #{clip_adapter_seg_forward.1} parent=39 // pred_fallthru
          _
      $region40: #{clip_adapter_seg_forward.1} parent=5 // pred_fallthru
        _
      %p272 = scmp.le.s32.totalorder 1, %s21
      %p273 = scmp.lt.s32.totalorder %s21, 3
      %p274 = pnand %p272, %p273
      %p275 = pneg %p274
      // Predicated region
      $region45: #{clip_adapter_seg_forward.1} parent=5 // pred_check
        _
      $region46: #{clip_adapter_seg_forward.1} parent=5 // pred_check_branch
        %277 = sbr.rel (%p274) target = $region48
      $region47: #{clip_adapter_seg_forward.1} parent=5 // pred_region
        %s278 = ssub.s32 %s21, 1
        %s279 = smul.u32 10, %s26
        %p280 = scmp.lt.s32.totalorder %s279, 19
        %s281 = scalar_select %p280, %s279, 19
        %s282 = smul.addr %s281, 4
        %s283 = smul.addr %s282, 8
        %s284 = scalar_lea.vmem %s0, %s283
        %p285 = pneg %p47
        %p286 = pneg %p44
        %p287 = pneg %p68
        %p288 = pneg %p65
        %p289 = pneg %p89
        %p290 = pneg %p86
        %p291 = pneg %p110
        %p292 = pneg %p107
        %p293 = pneg %p131
        %p294 = pneg %p128
        %p295 = pneg %p152
        %p296 = pneg %p149
        %p297 = pneg %p173
        %p298 = pneg %p170
        %p299 = pneg %p199
        %p300 = pneg %p196
        %s301 = sand.u32 %s186, 1
        %s302 = scalar_lea.sflag [#allocation3], %s301
        %s303 = sand.u32 %s186, 1
        %s304 = smul.addr %s303, 32
        %s305 = scalar_lea.vmem [#allocation2], %s304
        %p306 = pneg %p225
        %p307 = pneg %p222
        %s308 = sand.u32 %s212, 1
        %s309 = scalar_lea.sflag [#allocation5], %s308
        %s310 = sand.u32 %s212, 1
        %s311 = smul.addr %s310, 8
        %s312 = scalar_lea.vmem [#allocation4], %s311
        %s313 = smul.u32 10, %s26
        %p314 = scmp.lt.s32.totalorder %s313, 19
        %s315 = scalar_select %p314, %s313, 19
        %s316 = smul.addr %s315, 4
        %s317 = smul.addr %s316, 8
        %s318 = scalar_lea.vmem %s0, %s317
        %s319 = smul.u32 10, %s26
        %v320 = vld [vmem:[%s318] sm:$0xff]
        %v321 = vld [vmem:[%s318 + $0x8] sm:$0xff]
        %v322 = vld [vmem:[%s318 + $0x10] sm:$0xff]
        %v323 = vld [vmem:[%s318 + $0x18] sm:$0xff]
        %v324 = vld [vmem:[%s318 + $0x20] sm:$0xff]
        %v325 = vld [vmem:[%s318 + $0x28] sm:$0xff]
        %v326 = vld [vmem:[%s318 + $0x30] sm:$0xff]
        %v327 = vld [vmem:[%s318 + $0x38] sm:$0xff]
        %v328 = vld [vmem:[%s318 + $0x40] sm:$0xff]
        %v329 = vld [vmem:[%s318 + $0x48] sm:$0xff]
        %v330 = vld [vmem:[%s318 + $0x50] sm:$0xff]
        %v331 = vld [vmem:[%s318 + $0x58] sm:$0xff]
        %v332 = vld [vmem:[%s318 + $0x60] sm:$0xff]
        %v333 = vld [vmem:[%s318 + $0x68] sm:$0xff]
        %v334 = vld [vmem:[%s318 + $0x70] sm:$0xff]
        %v335 = vld [vmem:[%s318 + $0x78] sm:$0xff]
        %v336 = vld [vmem:[%s318 + $0x80] sm:$0xff]
        %v337 = vld [vmem:[%s318 + $0x88] sm:$0xff]
        %v338 = vld [vmem:[%s318 + $0x90] sm:$0xff]
        %v339 = vld [vmem:[%s318 + $0x98] sm:$0xff]
        %v340 = vld [vmem:[%s318 + $0xa0] sm:$0xff]
        %v341 = vld [vmem:[%s318 + $0xa8] sm:$0xff]
        %v342 = vld [vmem:[%s318 + $0xb0] sm:$0xff]
        %v343 = vld [vmem:[%s318 + $0xb8] sm:$0xff]
        %v344 = vld [vmem:[%s318 + $0xc0] sm:$0xff]
        %v345 = vld [vmem:[%s318 + $0xc8] sm:$0xff]
        %v346 = vld [vmem:[%s318 + $0xd0] sm:$0xff]
        %v347 = vld [vmem:[%s318 + $0xd8] sm:$0xff]
        %v348 = vld [vmem:[%s318 + $0xe0] sm:$0xff]
        %v349 = vld [vmem:[%s318 + $0xe8] sm:$0xff]
        %v350 = vld [vmem:[%s318 + $0xf0] sm:$0xff]
        %v351 = vld [vmem:[%s318 + $0xf8] sm:$0xff]
        %v352 = vld [vmem:[%s318 + $0x100] sm:$0xff]
        %v353 = vld [vmem:[%s318 + $0x108] sm:$0xff]
        %v354 = vld [vmem:[%s318 + $0x110] sm:$0xff]
        %v355 = vld [vmem:[%s318 + $0x118] sm:$0xff]
        %v356 = vld [vmem:[%s318 + $0x120] sm:$0xff]
        %v357 = vld [vmem:[%s318 + $0x128] sm:$0xff]
        %v358 = vld [vmem:[%s318 + $0x130] sm:$0xff]
        %v359 = vld [vmem:[%s318 + $0x138] sm:$0xff]
        %v360 = vpack.c.bf16 %v324, %v320
        %v361 = vpack.c.bf16 %v325, %v321
        %v362 = vpack.c.bf16 %v326, %v322
        %v363 = vpack.c.bf16 %v327, %v323
        %v364 = vpack.c.bf16 %v332, %v328
        %v365 = vpack.c.bf16 %v333, %v329
        %v366 = vpack.c.bf16 %v334, %v330
        %v367 = vpack.c.bf16 %v335, %v331
        %v368 = vpack.c.bf16 %v340, %v336
        %v369 = vpack.c.bf16 %v341, %v337
        %v370 = vpack.c.bf16 %v342, %v338
        %v371 = vpack.c.bf16 %v343, %v339
        %v372 = vpack.c.bf16 %v348, %v344
        %v373 = vpack.c.bf16 %v349, %v345
        %v374 = vpack.c.bf16 %v350, %v346
        %v375 = vpack.c.bf16 %v351, %v347
        %v376 = vpack.c.bf16 %v356, %v352
        %v377 = vpack.c.bf16 %v357, %v353
        %v378 = vpack.c.bf16 %v358, %v354
        %v379 = vpack.c.bf16 %v359, %v355
        %v380 = vld [vmem:[%s1] sm:$0xf]
        %v381 = vld [vmem:[%s1 + $0x4] sm:$0xf]
        %v382 = vld [vmem:[%s1 + $0x8] sm:$0xf]
        %v383 = vld [vmem:[%s1 + $0xc] sm:$0xf]
        %v384 = vld [vmem:[%s1 + $0x10] sm:$0xf]
        %v385 = vld [vmem:[%s1 + $0x14] sm:$0xf]
        %v386 = vld [vmem:[%s1 + $0x18] sm:$0xf]
        %v387 = vld [vmem:[%s1 + $0x1c] sm:$0xf]
        %v388 = vld [vmem:[%s1 + $0x20] sm:$0xf]
        %v389 = vld [vmem:[%s1 + $0x24] sm:$0xf]
        %v390 = vld [vmem:[%s1 + $0x28] sm:$0xf]
        %v391 = vld [vmem:[%s1 + $0x2c] sm:$0xf]
        %v392 = vld [vmem:[%s1 + $0x30] sm:$0xf]
        %v393 = vld [vmem:[%s1 + $0x34] sm:$0xf]
        %v394 = vld [vmem:[%s1 + $0x38] sm:$0xf]
        %v395 = vld [vmem:[%s1 + $0x3c] sm:$0xf]
        %v396 = vld [vmem:[%s1 + $0x40] sm:$0xf]
        %v397 = vld [vmem:[%s1 + $0x44] sm:$0xf]
        %v398 = vld [vmem:[%s1 + $0x48] sm:$0xf]
        %v399 = vld [vmem:[%s1 + $0x4c] sm:$0xf]
        %v400 = vld [vmem:[%s1 + $0x50] sm:$0xf]
        %v401 = vld [vmem:[%s1 + $0x54] sm:$0xf]
        %v402 = vld [vmem:[%s1 + $0x58] sm:$0xf]
        %v403 = vld [vmem:[%s1 + $0x5c] sm:$0xf]
        %v404 = vld [vmem:[%s1 + $0x60] sm:$0xf]
        %v405 = vld [vmem:[%s1 + $0x64] sm:$0xf]
        %v406 = vld [vmem:[%s1 + $0x68] sm:$0xf]
        %v407 = vld [vmem:[%s1 + $0x6c] sm:$0xf]
        %v408 = vld [vmem:[%s1 + $0x70] sm:$0xf]
        %v409 = vld [vmem:[%s1 + $0x74] sm:$0xf]
        %v410 = vld [vmem:[%s1 + $0x78] sm:$0xf]
        %v411 = vld [vmem:[%s1 + $0x7c] sm:$0xf]
        %v412 = vld [vmem:[%s1 + $0x80] sm:$0xf]
        %v413 = vld [vmem:[%s1 + $0x84] sm:$0xf]
        %v414 = vld [vmem:[%s1 + $0x88] sm:$0xf]
        %v415 = vld [vmem:[%s1 + $0x8c] sm:$0xf]
        %v416 = vld [vmem:[%s1 + $0x90] sm:$0xf]
        %v417 = vld [vmem:[%s1 + $0x94] sm:$0xf]
        %v418 = vld [vmem:[%s1 + $0x98] sm:$0xf]
        %v419 = vld [vmem:[%s1 + $0x9c] sm:$0xf]
        %v420 = vld [vmem:[%s1 + $0xa0] sm:$0xf]
        %v421 = vld [vmem:[%s1 + $0xa4] sm:$0xf]
        %v422 = vld [vmem:[%s1 + $0xa8] sm:$0xf]
        %v423 = vld [vmem:[%s1 + $0xac] sm:$0xf]
        %v424 = vld [vmem:[%s1 + $0xb0] sm:$0xf]
        %v425 = vld [vmem:[%s1 + $0xb4] sm:$0xf]
        %v426 = vld [vmem:[%s1 + $0xb8] sm:$0xf]
        %v427 = vld [vmem:[%s1 + $0xbc] sm:$0xf]
        %v428 = vld [vmem:[%s1 + $0xc0] sm:$0xf]
        %v429 = vld [vmem:[%s1 + $0xc4] sm:$0xf]
        %v430 = vld [vmem:[%s1 + $0xc8] sm:$0xf]
        %v431 = vld [vmem:[%s1 + $0xcc] sm:$0xf]
        %v432 = vld [vmem:[%s1 + $0xd0] sm:$0xf]
        %v433 = vld [vmem:[%s1 + $0xd4] sm:$0xf]
        %v434 = vld [vmem:[%s1 + $0xd8] sm:$0xf]
        %v435 = vld [vmem:[%s1 + $0xdc] sm:$0xf]
        %v436 = vld [vmem:[%s1 + $0xe0] sm:$0xf]
        %v437 = vld [vmem:[%s1 + $0xe4] sm:$0xf]
        %v438 = vld [vmem:[%s1 + $0xe8] sm:$0xf]
        %v439 = vld [vmem:[%s1 + $0xec] sm:$0xf]
        %v440 = vld [vmem:[%s1 + $0xf0] sm:$0xf]
        %v441 = vld [vmem:[%s1 + $0xf4] sm:$0xf]
        %v442 = vld [vmem:[%s1 + $0xf8] sm:$0xf]
        %v443 = vld [vmem:[%s1 + $0xfc] sm:$0xf]
        %v444 = vld [vmem:[%s2] sm:$0x1]
        %v446 = vperm.slane %v444, 0
        %v512 = vunpack.c.l.b16 %v380
        %v513 = vunpack.c.l.b16 %v381
        %v514 = vunpack.c.l.b16 %v382
        %v515 = vunpack.c.l.b16 %v383
        %v516 = vunpack.c.l.b16 %v384
        %v517 = vunpack.c.l.b16 %v385
        %v518 = vunpack.c.l.b16 %v386
        %v519 = vunpack.c.l.b16 %v387
        %v520 = vunpack.c.l.b16 %v388
        %v521 = vunpack.c.l.b16 %v389
        %v522 = vunpack.c.l.b16 %v390
        %v523 = vunpack.c.l.b16 %v391
        %v524 = vunpack.c.l.b16 %v392
        %v525 = vunpack.c.l.b16 %v393
        %v526 = vunpack.c.l.b16 %v394
        %v527 = vunpack.c.l.b16 %v395
        %v528 = vunpack.c.l.b16 %v396
        %v529 = vunpack.c.l.b16 %v397
        %v530 = vunpack.c.l.b16 %v398
        %v531 = vunpack.c.l.b16 %v399
        %v532 = vunpack.c.l.b16 %v400
        %v533 = vunpack.c.l.b16 %v401
        %v534 = vunpack.c.l.b16 %v402
        %v535 = vunpack.c.l.b16 %v403
        %v536 = vunpack.c.l.b16 %v404
        %v537 = vunpack.c.l.b16 %v405
        %v538 = vunpack.c.l.b16 %v406
        %v539 = vunpack.c.l.b16 %v407
        %v540 = vunpack.c.l.b16 %v408
        %v541 = vunpack.c.l.b16 %v409
        %v542 = vunpack.c.l.b16 %v410
        %v543 = vunpack.c.l.b16 %v411
        %v544 = vunpack.c.l.b16 %v412
        %v545 = vunpack.c.l.b16 %v413
        %v546 = vunpack.c.l.b16 %v414
        %v547 = vunpack.c.l.b16 %v415
        %v548 = vunpack.c.l.b16 %v416
        %v549 = vunpack.c.l.b16 %v417
        %v550 = vunpack.c.l.b16 %v418
        %v551 = vunpack.c.l.b16 %v419
        %v552 = vunpack.c.l.b16 %v420
        %v553 = vunpack.c.l.b16 %v421
        %v554 = vunpack.c.l.b16 %v422
        %v555 = vunpack.c.l.b16 %v423
        %v556 = vunpack.c.l.b16 %v424
        %v557 = vunpack.c.l.b16 %v425
        %v558 = vunpack.c.l.b16 %v426
        %v559 = vunpack.c.l.b16 %v427
        %v560 = vunpack.c.l.b16 %v428
        %v561 = vunpack.c.l.b16 %v429
        %v562 = vunpack.c.l.b16 %v430
        %v563 = vunpack.c.l.b16 %v431
        %v564 = vunpack.c.l.b16 %v432
        %v565 = vunpack.c.l.b16 %v433
        %v566 = vunpack.c.l.b16 %v434
        %v567 = vunpack.c.l.b16 %v435
        %v568 = vunpack.c.l.b16 %v436
        %v569 = vunpack.c.l.b16 %v437
        %v570 = vunpack.c.l.b16 %v438
        %v571 = vunpack.c.l.b16 %v439
        %v572 = vunpack.c.l.b16 %v440
        %v573 = vunpack.c.l.b16 %v441
        %v574 = vunpack.c.l.b16 %v442
        %v575 = vunpack.c.l.b16 %v443
        %v576 = vpack.c.b16 %v513, %v512
        %v577 = vpack.c.b16 %v515, %v514
        %v578 = vpack.c.b16 %v517, %v516
        %v579 = vpack.c.b16 %v519, %v518
        %v580 = vpack.c.b16 %v521, %v520
        %v581 = vpack.c.b16 %v523, %v522
        %v582 = vpack.c.b16 %v525, %v524
        %v583 = vpack.c.b16 %v527, %v526
        %v584 = vpack.c.b16 %v529, %v528
        %v585 = vpack.c.b16 %v531, %v530
        %v586 = vpack.c.b16 %v533, %v532
        %v587 = vpack.c.b16 %v535, %v534
        %v588 = vpack.c.b16 %v537, %v536
        %v589 = vpack.c.b16 %v539, %v538
        %v590 = vpack.c.b16 %v541, %v540
        %v591 = vpack.c.b16 %v543, %v542
        %v592 = vpack.c.b16 %v545, %v544
        %v593 = vpack.c.b16 %v547, %v546
        %v594 = vpack.c.b16 %v549, %v548
        %v595 = vpack.c.b16 %v551, %v550
        %v596 = vpack.c.b16 %v553, %v552
        %v597 = vpack.c.b16 %v555, %v554
        %v598 = vpack.c.b16 %v557, %v556
        %v599 = vpack.c.b16 %v559, %v558
        %v600 = vpack.c.b16 %v561, %v560
        %v601 = vpack.c.b16 %v563, %v562
        %v602 = vpack.c.b16 %v565, %v564
        %v603 = vpack.c.b16 %v567, %v566
        %v604 = vpack.c.b16 %v569, %v568
        %v605 = vpack.c.b16 %v571, %v570
        %v606 = vpack.c.b16 %v573, %v572
        %v607 = vpack.c.b16 %v575, %v574
        %640 = vmatpush.bf16.msra.mxu0 %v583
        %641 = vmatpush.bf16.msra.mxu0 %v582
        %642 = vmatpush.bf16.msra.mxu0 %v581
        %643 = vmatpush.bf16.msra.mxu0 %v580
        %644 = vmatpush.bf16.msra.mxu0 %v579
        %645 = vmatpush.bf16.msra.mxu0 %v578
        %646 = vmatpush.bf16.msra.mxu0 %v577
        %647 = vmatpush.bf16.msra.mxu0 %v576
        %648 = vmatmul.bf16.gmra.mxu0 %v360
        %v649 = vpop.f32.mrf.mxu0
        %v650 = vadd.f32 %v446, %v649
        %v651 = vpop.f32.mrf.mxu0
        %v652 = vadd.f32 %v446, %v651
        %653 = vmatmul.bf16.gmra.mxu0 %v364
        %v654 = vpop.f32.mrf.mxu0
        %v655 = vadd.f32 %v446, %v654
        %v656 = vpop.f32.mrf.mxu0
        %v657 = vadd.f32 %v446, %v656
        %658 = vmatmul.bf16.gmra.mxu0 %v368
        %v659 = vpop.f32.mrf.mxu0
        %v660 = vadd.f32 %v446, %v659
        %v661 = vpop.f32.mrf.mxu0
        %v662 = vadd.f32 %v446, %v661
        %663 = vmatmul.bf16.gmra.mxu0 %v372
        %v664 = vpop.f32.mrf.mxu0
        %v665 = vadd.f32 %v446, %v664
        %v666 = vpop.f32.mrf.mxu0
        %v667 = vadd.f32 %v446, %v666
        %668 = vmatmul.bf16.gmra.mxu0 %v376
        %v669 = vpop.f32.mrf.mxu0
        %v670 = vadd.f32 %v446, %v669
        %v671 = vpop.f32.mrf.mxu0
        %v672 = vadd.f32 %v446, %v671
        %673 = vdwg.mxu0
        %674 = vmatpush.bf16.msra.mxu0 %v591
        %675 = vmatpush.bf16.msra.mxu0 %v590
        %676 = vmatpush.bf16.msra.mxu0 %v589
        %677 = vmatpush.bf16.msra.mxu0 %v588
        %678 = vmatpush.bf16.msra.mxu0 %v587
        %679 = vmatpush.bf16.msra.mxu0 %v586
        %680 = vmatpush.bf16.msra.mxu0 %v585
        %681 = vmatpush.bf16.msra.mxu0 %v584
        %682 = vmatmul.bf16.gmra.mxu0 %v361
        %v683 = vpop.f32.mrf.mxu0
        %v684 = vadd.f32 %v650, %v683
        %v685 = vpop.f32.mrf.mxu0
        %v686 = vadd.f32 %v652, %v685
        %687 = vmatmul.bf16.gmra.mxu0 %v365
        %v688 = vpop.f32.mrf.mxu0
        %v689 = vadd.f32 %v655, %v688
        %v690 = vpop.f32.mrf.mxu0
        %v691 = vadd.f32 %v657, %v690
        %692 = vmatmul.bf16.gmra.mxu0 %v369
        %v693 = vpop.f32.mrf.mxu0
        %v694 = vadd.f32 %v660, %v693
        %v695 = vpop.f32.mrf.mxu0
        %v696 = vadd.f32 %v662, %v695
        %697 = vmatmul.bf16.gmra.mxu0 %v373
        %v698 = vpop.f32.mrf.mxu0
        %v699 = vadd.f32 %v665, %v698
        %v700 = vpop.f32.mrf.mxu0
        %v701 = vadd.f32 %v667, %v700
        %702 = vmatmul.bf16.gmra.mxu0 %v377
        %v703 = vpop.f32.mrf.mxu0
        %v704 = vadd.f32 %v670, %v703
        %v705 = vpop.f32.mrf.mxu0
        %v706 = vadd.f32 %v672, %v705
        %707 = vdwg.mxu0
        %708 = vmatpush.bf16.msra.mxu0 %v599
        %709 = vmatpush.bf16.msra.mxu0 %v598
        %710 = vmatpush.bf16.msra.mxu0 %v597
        %711 = vmatpush.bf16.msra.mxu0 %v596
        %712 = vmatpush.bf16.msra.mxu0 %v595
        %713 = vmatpush.bf16.msra.mxu0 %v594
        %714 = vmatpush.bf16.msra.mxu0 %v593
        %715 = vmatpush.bf16.msra.mxu0 %v592
        %716 = vmatmul.bf16.gmra.mxu0 %v362
        %v717 = vpop.f32.mrf.mxu0
        %v718 = vadd.f32 %v684, %v717
        %v719 = vpop.f32.mrf.mxu0
        %v720 = vadd.f32 %v686, %v719
        %721 = vmatmul.bf16.gmra.mxu0 %v366
        %v722 = vpop.f32.mrf.mxu0
        %v723 = vadd.f32 %v689, %v722
        %v724 = vpop.f32.mrf.mxu0
        %v725 = vadd.f32 %v691, %v724
        %726 = vmatmul.bf16.gmra.mxu0 %v370
        %v727 = vpop.f32.mrf.mxu0
        %v728 = vadd.f32 %v694, %v727
        %v729 = vpop.f32.mrf.mxu0
        %v730 = vadd.f32 %v696, %v729
        %731 = vmatmul.bf16.gmra.mxu0 %v374
        %v732 = vpop.f32.mrf.mxu0
        %v733 = vadd.f32 %v699, %v732
        %v734 = vpop.f32.mrf.mxu0
        %v735 = vadd.f32 %v701, %v734
        %736 = vmatmul.bf16.gmra.mxu0 %v378
        %v737 = vpop.f32.mrf.mxu0
        %v738 = vadd.f32 %v704, %v737
        %v739 = vpop.f32.mrf.mxu0
        %v740 = vadd.f32 %v706, %v739
        %741 = vdwg.mxu0
        %742 = vmatpush.bf16.msra.mxu0 %v607
        %743 = vmatpush.bf16.msra.mxu0 %v606
        %744 = vmatpush.bf16.msra.mxu0 %v605
        %745 = vmatpush.bf16.msra.mxu0 %v604
        %746 = vmatpush.bf16.msra.mxu0 %v603
        %747 = vmatpush.bf16.msra.mxu0 %v602
        %748 = vmatpush.bf16.msra.mxu0 %v601
        %749 = vmatpush.bf16.msra.mxu0 %v600
        %750 = vmatmul.bf16.gmra.mxu0 %v363
        %v751 = vpop.f32.mrf.mxu0
        %v752 = vadd.f32 %v718, %v751
        %v753 = vpop.f32.mrf.mxu0
        %v754 = vadd.f32 %v720, %v753
        %755 = vmatmul.bf16.gmra.mxu0 %v367
        %v756 = vpop.f32.mrf.mxu0
        %v757 = vadd.f32 %v723, %v756
        %v758 = vpop.f32.mrf.mxu0
        %v759 = vadd.f32 %v725, %v758
        %760 = vmatmul.bf16.gmra.mxu0 %v371
        %v761 = vpop.f32.mrf.mxu0
        %v762 = vadd.f32 %v728, %v761
        %v763 = vpop.f32.mrf.mxu0
        %v764 = vadd.f32 %v730, %v763
        %765 = vmatmul.bf16.gmra.mxu0 %v375
        %v766 = vpop.f32.mrf.mxu0
        %v767 = vadd.f32 %v733, %v766
        %v768 = vpop.f32.mrf.mxu0
        %v769 = vadd.f32 %v735, %v768
        %770 = vmatmul.bf16.gmra.mxu0 %v379
        %v771 = vpop.f32.mrf.mxu0
        %v772 = vadd.f32 %v738, %v771
        %v773 = vpop.f32.mrf.mxu0
        %v774 = vadd.f32 %v740, %v773
        %775 = vdwg.mxu0
        %v776 = vmax.f32 %v752, 0.0
        %v777 = vmax.f32 %v754, 0.0
        %v778 = vmax.f32 %v757, 0.0
        %v779 = vmax.f32 %v759, 0.0
        %v780 = vmax.f32 %v762, 0.0
        %v781 = vmax.f32 %v764, 0.0
        %v782 = vmax.f32 %v767, 0.0
        %v783 = vmax.f32 %v769, 0.0
        %v784 = vmax.f32 %v772, 0.0
        %v785 = vmax.f32 %v774, 0.0
        %v786 = vpack.c.bf16 %v777, %v776
        %v787 = vpack.c.bf16 %v779, %v778
        %v788 = vpack.c.bf16 %v781, %v780
        %v789 = vpack.c.bf16 %v783, %v782
        %v790 = vpack.c.bf16 %v785, %v784
        %v791 = vld [vmem:[%s3] sm:$0xff]
        %v792 = vld [vmem:[%s3 + $0x8] sm:$0xff]
        %v793 = vld [vmem:[%s3 + $0x10] sm:$0xff]
        %v794 = vld [vmem:[%s3 + $0x18] sm:$0xff]
        %v795 = vld [vmem:[%s3 + $0x20] sm:$0xff]
        %v796 = vld [vmem:[%s3 + $0x28] sm:$0xff]
        %v797 = vld [vmem:[%s3 + $0x30] sm:$0xff]
        %v798 = vld [vmem:[%s3 + $0x38] sm:$0xff]
        %v799 = vld [vmem:[%s3 + $0x40] sm:$0xff]
        %v800 = vld [vmem:[%s3 + $0x48] sm:$0xff]
        %v801 = vld [vmem:[%s3 + $0x50] sm:$0xff]
        %v802 = vld [vmem:[%s3 + $0x58] sm:$0xff]
        %v803 = vld [vmem:[%s3 + $0x60] sm:$0xff]
        %v804 = vld [vmem:[%s3 + $0x68] sm:$0xff]
        %v805 = vld [vmem:[%s3 + $0x70] sm:$0xff]
        %v806 = vld [vmem:[%s3 + $0x78] sm:$0xff]
        %v807 = vld [vmem:[%s3 + $0x80] sm:$0xff]
        %v808 = vld [vmem:[%s3 + $0x88] sm:$0xff]
        %v809 = vld [vmem:[%s3 + $0x90] sm:$0xff]
        %v810 = vld [vmem:[%s3 + $0x98] sm:$0xff]
        %v811 = vld [vmem:[%s3 + $0xa0] sm:$0xff]
        %v812 = vld [vmem:[%s3 + $0xa8] sm:$0xff]
        %v813 = vld [vmem:[%s3 + $0xb0] sm:$0xff]
        %v814 = vld [vmem:[%s3 + $0xb8] sm:$0xff]
        %v815 = vld [vmem:[%s3 + $0xc0] sm:$0xff]
        %v816 = vld [vmem:[%s3 + $0xc8] sm:$0xff]
        %v817 = vld [vmem:[%s3 + $0xd0] sm:$0xff]
        %v818 = vld [vmem:[%s3 + $0xd8] sm:$0xff]
        %v819 = vld [vmem:[%s3 + $0xe0] sm:$0xff]
        %v820 = vld [vmem:[%s3 + $0xe8] sm:$0xff]
        %v821 = vld [vmem:[%s3 + $0xf0] sm:$0xff]
        %v822 = vld [vmem:[%s3 + $0xf8] sm:$0xff]
        %v823 = vld [vmem:[%s4] sm:$0xf]
        %v825 = vperm.slane %v823, 0
        %v826 = vperm.slane %v823, 1
        %v827 = vperm.slane %v823, 2
        %v828 = vperm.slane %v823, 3
        %v865 = vunpack.c.l.b16 %v791
        %v866 = vunpack.c.h.b16 %v791
        %v867 = vunpack.c.l.b16 %v792
        %v868 = vunpack.c.h.b16 %v792
        %v869 = vunpack.c.l.b16 %v793
        %v870 = vunpack.c.h.b16 %v793
        %v871 = vunpack.c.l.b16 %v794
        %v872 = vunpack.c.h.b16 %v794
        %v873 = vunpack.c.l.b16 %v795
        %v874 = vunpack.c.h.b16 %v795
        %v875 = vunpack.c.l.b16 %v796
        %v876 = vunpack.c.h.b16 %v796
        %v877 = vunpack.c.l.b16 %v797
        %v878 = vunpack.c.h.b16 %v797
        %v879 = vunpack.c.l.b16 %v798
        %v880 = vunpack.c.h.b16 %v798
        %v881 = vunpack.c.l.b16 %v799
        %v882 = vunpack.c.h.b16 %v799
        %v883 = vunpack.c.l.b16 %v800
        %v884 = vunpack.c.h.b16 %v800
        %v885 = vunpack.c.l.b16 %v801
        %v886 = vunpack.c.h.b16 %v801
        %v887 = vunpack.c.l.b16 %v802
        %v888 = vunpack.c.h.b16 %v802
        %v889 = vunpack.c.l.b16 %v803
        %v890 = vunpack.c.h.b16 %v803
        %v891 = vunpack.c.l.b16 %v804
        %v892 = vunpack.c.h.b16 %v804
        %v893 = vunpack.c.l.b16 %v805
        %v894 = vunpack.c.h.b16 %v805
        %v895 = vunpack.c.l.b16 %v806
        %v896 = vunpack.c.h.b16 %v806
        %v897 = vunpack.c.l.b16 %v807
        %v898 = vunpack.c.h.b16 %v807
        %v899 = vunpack.c.l.b16 %v808
        %v900 = vunpack.c.h.b16 %v808
        %v901 = vunpack.c.l.b16 %v809
        %v902 = vunpack.c.h.b16 %v809
        %v903 = vunpack.c.l.b16 %v810
        %v904 = vunpack.c.h.b16 %v810
        %v905 = vunpack.c.l.b16 %v811
        %v906 = vunpack.c.h.b16 %v811
        %v907 = vunpack.c.l.b16 %v812
        %v908 = vunpack.c.h.b16 %v812
        %v909 = vunpack.c.l.b16 %v813
        %v910 = vunpack.c.h.b16 %v813
        %v911 = vunpack.c.l.b16 %v814
        %v912 = vunpack.c.h.b16 %v814
        %v913 = vunpack.c.l.b16 %v815
        %v914 = vunpack.c.h.b16 %v815
        %v915 = vunpack.c.l.b16 %v816
        %v916 = vunpack.c.h.b16 %v816
        %v917 = vunpack.c.l.b16 %v817
        %v918 = vunpack.c.h.b16 %v817
        %v919 = vunpack.c.l.b16 %v818
        %v920 = vunpack.c.h.b16 %v818
        %v921 = vunpack.c.l.b16 %v819
        %v922 = vunpack.c.h.b16 %v819
        %v923 = vunpack.c.l.b16 %v820
        %v924 = vunpack.c.h.b16 %v820
        %v925 = vunpack.c.l.b16 %v821
        %v926 = vunpack.c.h.b16 %v821
        %v927 = vunpack.c.l.b16 %v822
        %v928 = vunpack.c.h.b16 %v822
        %v929 = vpack.c.b16 %v869, %v865
        %v930 = vpack.c.b16 %v870, %v866
        %v931 = vpack.c.b16 %v871, %v867
        %v932 = vpack.c.b16 %v872, %v868
        %v933 = vpack.c.b16 %v877, %v873
        %v934 = vpack.c.b16 %v878, %v874
        %v935 = vpack.c.b16 %v879, %v875
        %v936 = vpack.c.b16 %v880, %v876
        %v937 = vpack.c.b16 %v885, %v881
        %v938 = vpack.c.b16 %v886, %v882
        %v939 = vpack.c.b16 %v887, %v883
        %v940 = vpack.c.b16 %v888, %v884
        %v941 = vpack.c.b16 %v893, %v889
        %v942 = vpack.c.b16 %v894, %v890
        %v943 = vpack.c.b16 %v895, %v891
        %v944 = vpack.c.b16 %v896, %v892
        %v945 = vpack.c.b16 %v901, %v897
        %v946 = vpack.c.b16 %v902, %v898
        %v947 = vpack.c.b16 %v903, %v899
        %v948 = vpack.c.b16 %v904, %v900
        %v949 = vpack.c.b16 %v909, %v905
        %v950 = vpack.c.b16 %v910, %v906
        %v951 = vpack.c.b16 %v911, %v907
        %v952 = vpack.c.b16 %v912, %v908
        %v953 = vpack.c.b16 %v917, %v913
        %v954 = vpack.c.b16 %v918, %v914
        %v955 = vpack.c.b16 %v919, %v915
        %v956 = vpack.c.b16 %v920, %v916
        %v957 = vpack.c.b16 %v925, %v921
        %v958 = vpack.c.b16 %v926, %v922
        %v959 = vpack.c.b16 %v927, %v923
        %v960 = vpack.c.b16 %v928, %v924
        %993 = vmatpush.bf16.msra.mxu0 %v957
        %994 = vmatpush.bf16.msra.mxu0 %v953
        %995 = vmatpush.bf16.msra.mxu0 %v949
        %996 = vmatpush.bf16.msra.mxu0 %v945
        %997 = vmatpush.bf16.msra.mxu0 %v941
        %998 = vmatpush.bf16.msra.mxu0 %v937
        %999 = vmatpush.bf16.msra.mxu0 %v933
        %1000 = vmatpush.bf16.msra.mxu0 %v929
        %1001 = vmatmul.bf16.gmra.mxu0 %v786
        %v1002 = vpop.f32.mrf.mxu0
        %v1003 = vadd.f32 %v825, %v1002
        %v1004 = vpop.f32.mrf.mxu0
        %v1005 = vadd.f32 %v825, %v1004
        %1006 = vmatmul.bf16.gmra.mxu0 %v787
        %v1007 = vpop.f32.mrf.mxu0
        %v1008 = vadd.f32 %v825, %v1007
        %v1009 = vpop.f32.mrf.mxu0
        %v1010 = vadd.f32 %v825, %v1009
        %1011 = vmatmul.bf16.gmra.mxu0 %v788
        %v1012 = vpop.f32.mrf.mxu0
        %v1013 = vadd.f32 %v825, %v1012
        %v1014 = vpop.f32.mrf.mxu0
        %v1015 = vadd.f32 %v825, %v1014
        %1016 = vmatmul.bf16.gmra.mxu0 %v789
        %v1017 = vpop.f32.mrf.mxu0
        %v1018 = vadd.f32 %v825, %v1017
        %v1019 = vpop.f32.mrf.mxu0
        %v1020 = vadd.f32 %v825, %v1019
        %1021 = vmatmul.bf16.gmra.mxu0 %v790
        %v1022 = vpop.f32.mrf.mxu0
        %v1023 = vadd.f32 %v825, %v1022
        %v1024 = vpop.f32.mrf.mxu0
        %v1025 = vadd.f32 %v825, %v1024
        %1026 = vdwg.mxu0
        %1027 = vmatpush.bf16.msra.mxu0 %v958
        %1028 = vmatpush.bf16.msra.mxu0 %v954
        %1029 = vmatpush.bf16.msra.mxu0 %v950
        %1030 = vmatpush.bf16.msra.mxu0 %v946
        %1031 = vmatpush.bf16.msra.mxu0 %v942
        %1032 = vmatpush.bf16.msra.mxu0 %v938
        %1033 = vmatpush.bf16.msra.mxu0 %v934
        %1034 = vmatpush.bf16.msra.mxu0 %v930
        %1035 = vmatmul.bf16.gmra.mxu0 %v786
        %v1036 = vpop.f32.mrf.mxu0
        %v1037 = vadd.f32 %v826, %v1036
        %v1038 = vpop.f32.mrf.mxu0
        %v1039 = vadd.f32 %v826, %v1038
        %1040 = vmatmul.bf16.gmra.mxu0 %v787
        %v1041 = vpop.f32.mrf.mxu0
        %v1042 = vadd.f32 %v826, %v1041
        %v1043 = vpop.f32.mrf.mxu0
        %v1044 = vadd.f32 %v826, %v1043
        %1045 = vmatmul.bf16.gmra.mxu0 %v788
        %v1046 = vpop.f32.mrf.mxu0
        %v1047 = vadd.f32 %v826, %v1046
        %v1048 = vpop.f32.mrf.mxu0
        %v1049 = vadd.f32 %v826, %v1048
        %1050 = vmatmul.bf16.gmra.mxu0 %v789
        %v1051 = vpop.f32.mrf.mxu0
        %v1052 = vadd.f32 %v826, %v1051
        %v1053 = vpop.f32.mrf.mxu0
        %v1054 = vadd.f32 %v826, %v1053
        %1055 = vmatmul.bf16.gmra.mxu0 %v790
        %v1056 = vpop.f32.mrf.mxu0
        %v1057 = vadd.f32 %v826, %v1056
        %v1058 = vpop.f32.mrf.mxu0
        %v1059 = vadd.f32 %v826, %v1058
        %1060 = vdwg.mxu0
        %1061 = vmatpush.bf16.msra.mxu0 %v959
        %1062 = vmatpush.bf16.msra.mxu0 %v955
        %1063 = vmatpush.bf16.msra.mxu0 %v951
        %1064 = vmatpush.bf16.msra.mxu0 %v947
        %1065 = vmatpush.bf16.msra.mxu0 %v943
        %1066 = vmatpush.bf16.msra.mxu0 %v939
        %1067 = vmatpush.bf16.msra.mxu0 %v935
        %1068 = vmatpush.bf16.msra.mxu0 %v931
        %1069 = vmatmul.bf16.gmra.mxu0 %v786
        %v1070 = vpop.f32.mrf.mxu0
        %v1071 = vadd.f32 %v827, %v1070
        %v1072 = vpop.f32.mrf.mxu0
        %v1073 = vadd.f32 %v827, %v1072
        %1074 = vmatmul.bf16.gmra.mxu0 %v787
        %v1075 = vpop.f32.mrf.mxu0
        %v1076 = vadd.f32 %v827, %v1075
        %v1077 = vpop.f32.mrf.mxu0
        %v1078 = vadd.f32 %v827, %v1077
        %1079 = vmatmul.bf16.gmra.mxu0 %v788
        %v1080 = vpop.f32.mrf.mxu0
        %v1081 = vadd.f32 %v827, %v1080
        %v1082 = vpop.f32.mrf.mxu0
        %v1083 = vadd.f32 %v827, %v1082
        %1084 = vmatmul.bf16.gmra.mxu0 %v789
        %v1085 = vpop.f32.mrf.mxu0
        %v1086 = vadd.f32 %v827, %v1085
        %v1087 = vpop.f32.mrf.mxu0
        %v1088 = vadd.f32 %v827, %v1087
        %1089 = vmatmul.bf16.gmra.mxu0 %v790
        %v1090 = vpop.f32.mrf.mxu0
        %v1091 = vadd.f32 %v827, %v1090
        %v1092 = vpop.f32.mrf.mxu0
        %v1093 = vadd.f32 %v827, %v1092
        %1094 = vdwg.mxu0
        %1095 = vmatpush.bf16.msra.mxu0 %v960
        %1096 = vmatpush.bf16.msra.mxu0 %v956
        %1097 = vmatpush.bf16.msra.mxu0 %v952
        %1098 = vmatpush.bf16.msra.mxu0 %v948
        %1099 = vmatpush.bf16.msra.mxu0 %v944
        %1100 = vmatpush.bf16.msra.mxu0 %v940
        %1101 = vmatpush.bf16.msra.mxu0 %v936
        %1102 = vmatpush.bf16.msra.mxu0 %v932
        %1103 = vmatmul.bf16.gmra.mxu0 %v786
        %v1104 = vpop.f32.mrf.mxu0
        %v1105 = vadd.f32 %v828, %v1104
        %v1106 = vpop.f32.mrf.mxu0
        %v1107 = vadd.f32 %v828, %v1106
        %1108 = vmatmul.bf16.gmra.mxu0 %v787
        %v1109 = vpop.f32.mrf.mxu0
        %v1110 = vadd.f32 %v828, %v1109
        %v1111 = vpop.f32.mrf.mxu0
        %v1112 = vadd.f32 %v828, %v1111
        %1113 = vmatmul.bf16.gmra.mxu0 %v788
        %v1114 = vpop.f32.mrf.mxu0
        %v1115 = vadd.f32 %v828, %v1114
        %v1116 = vpop.f32.mrf.mxu0
        %v1117 = vadd.f32 %v828, %v1116
        %1118 = vmatmul.bf16.gmra.mxu0 %v789
        %v1119 = vpop.f32.mrf.mxu0
        %v1120 = vadd.f32 %v828, %v1119
        %v1121 = vpop.f32.mrf.mxu0
        %v1122 = vadd.f32 %v828, %v1121
        %1123 = vmatmul.bf16.gmra.mxu0 %v790
        %v1124 = vpop.f32.mrf.mxu0
        %v1125 = vadd.f32 %v828, %v1124
        %v1126 = vpop.f32.mrf.mxu0
        %v1127 = vadd.f32 %v828, %v1126
        %1128 = vdwg.mxu0
        %v1129 = vmax.f32 %v1003, 0.0
        %v1130 = vmax.f32 %v1037, 0.0
        %v1131 = vmax.f32 %v1071, 0.0
        %v1132 = vmax.f32 %v1105, 0.0
        %v1133 = vmax.f32 %v1005, 0.0
        %v1134 = vmax.f32 %v1039, 0.0
        %v1135 = vmax.f32 %v1073, 0.0
        %v1136 = vmax.f32 %v1107, 0.0
        %v1137 = vmax.f32 %v1008, 0.0
        %v1138 = vmax.f32 %v1042, 0.0
        %v1139 = vmax.f32 %v1076, 0.0
        %v1140 = vmax.f32 %v1110, 0.0
        %v1141 = vmax.f32 %v1010, 0.0
        %v1142 = vmax.f32 %v1044, 0.0
        %v1143 = vmax.f32 %v1078, 0.0
        %v1144 = vmax.f32 %v1112, 0.0
        %v1145 = vmax.f32 %v1013, 0.0
        %v1146 = vmax.f32 %v1047, 0.0
        %v1147 = vmax.f32 %v1081, 0.0
        %v1148 = vmax.f32 %v1115, 0.0
        %v1149 = vmax.f32 %v1015, 0.0
        %v1150 = vmax.f32 %v1049, 0.0
        %v1151 = vmax.f32 %v1083, 0.0
        %v1152 = vmax.f32 %v1117, 0.0
        %v1153 = vmax.f32 %v1018, 0.0
        %v1154 = vmax.f32 %v1052, 0.0
        %v1155 = vmax.f32 %v1086, 0.0
        %v1156 = vmax.f32 %v1120, 0.0
        %v1157 = vmax.f32 %v1020, 0.0
        %v1158 = vmax.f32 %v1054, 0.0
        %v1159 = vmax.f32 %v1088, 0.0
        %v1160 = vmax.f32 %v1122, 0.0
        %v1161 = vmax.f32 %v1023, 0.0
        %v1162 = vmax.f32 %v1057, 0.0
        %v1163 = vmax.f32 %v1091, 0.0
        %v1164 = vmax.f32 %v1125, 0.0
        %v1165 = vmax.f32 %v1025, 0.0
        %v1166 = vmax.f32 %v1059, 0.0
        %v1167 = vmax.f32 %v1093, 0.0
        %v1168 = vmax.f32 %v1127, 0.0
        %v1169 = vmul.f32 %v1129, 0.5
        %v1170 = vmul.f32 %v1130, 0.5
        %v1171 = vmul.f32 %v1131, 0.5
        %v1172 = vmul.f32 %v1132, 0.5
        %v1173 = vmul.f32 %v1133, 0.5
        %v1174 = vmul.f32 %v1134, 0.5
        %v1175 = vmul.f32 %v1135, 0.5
        %v1176 = vmul.f32 %v1136, 0.5
        %v1177 = vmul.f32 %v1137, 0.5
        %v1178 = vmul.f32 %v1138, 0.5
        %v1179 = vmul.f32 %v1139, 0.5
        %v1180 = vmul.f32 %v1140, 0.5
        %v1181 = vmul.f32 %v1141, 0.5
        %v1182 = vmul.f32 %v1142, 0.5
        %v1183 = vmul.f32 %v1143, 0.5
        %v1184 = vmul.f32 %v1144, 0.5
        %v1185 = vmul.f32 %v1145, 0.5
        %v1186 = vmul.f32 %v1146, 0.5
        %v1187 = vmul.f32 %v1147, 0.5
        %v1188 = vmul.f32 %v1148, 0.5
        %v1189 = vmul.f32 %v1149, 0.5
        %v1190 = vmul.f32 %v1150, 0.5
        %v1191 = vmul.f32 %v1151, 0.5
        %v1192 = vmul.f32 %v1152, 0.5
        %v1193 = vmul.f32 %v1153, 0.5
        %v1194 = vmul.f32 %v1154, 0.5
        %v1195 = vmul.f32 %v1155, 0.5
        %v1196 = vmul.f32 %v1156, 0.5
        %v1197 = vmul.f32 %v1157, 0.5
        %v1198 = vmul.f32 %v1158, 0.5
        %v1199 = vmul.f32 %v1159, 0.5
        %v1200 = vmul.f32 %v1160, 0.5
        %v1201 = vmul.f32 %v1161, 0.5
        %v1202 = vmul.f32 %v1162, 0.5
        %v1203 = vmul.f32 %v1163, 0.5
        %v1204 = vmul.f32 %v1164, 0.5
        %v1205 = vmul.f32 %v1165, 0.5
        %v1206 = vmul.f32 %v1166, 0.5
        %v1207 = vmul.f32 %v1167, 0.5
        %v1208 = vmul.f32 %v1168, 0.5
        %v1209 = vmul.f32 %v320, 0.5
        %v1210 = vmul.f32 %v321, 0.5
        %v1211 = vmul.f32 %v322, 0.5
        %v1212 = vmul.f32 %v323, 0.5
        %v1213 = vmul.f32 %v324, 0.5
        %v1214 = vmul.f32 %v325, 0.5
        %v1215 = vmul.f32 %v326, 0.5
        %v1216 = vmul.f32 %v327, 0.5
        %v1217 = vmul.f32 %v328, 0.5
        %v1218 = vmul.f32 %v329, 0.5
        %v1219 = vmul.f32 %v330, 0.5
        %v1220 = vmul.f32 %v331, 0.5
        %v1221 = vmul.f32 %v332, 0.5
        %v1222 = vmul.f32 %v333, 0.5
        %v1223 = vmul.f32 %v334, 0.5
        %v1224 = vmul.f32 %v335, 0.5
        %v1225 = vmul.f32 %v336, 0.5
        %v1226 = vmul.f32 %v337, 0.5
        %v1227 = vmul.f32 %v338, 0.5
        %v1228 = vmul.f32 %v339, 0.5
        %v1229 = vmul.f32 %v340, 0.5
        %v1230 = vmul.f32 %v341, 0.5
        %v1231 = vmul.f32 %v342, 0.5
        %v1232 = vmul.f32 %v343, 0.5
        %v1233 = vmul.f32 %v344, 0.5
        %v1234 = vmul.f32 %v345, 0.5
        %v1235 = vmul.f32 %v346, 0.5
        %v1236 = vmul.f32 %v347, 0.5
        %v1237 = vmul.f32 %v348, 0.5
        %v1238 = vmul.f32 %v349, 0.5
        %v1239 = vmul.f32 %v350, 0.5
        %v1240 = vmul.f32 %v351, 0.5
        %v1241 = vmul.f32 %v352, 0.5
        %v1242 = vmul.f32 %v353, 0.5
        %v1243 = vmul.f32 %v354, 0.5
        %v1244 = vmul.f32 %v355, 0.5
        %v1245 = vmul.f32 %v356, 0.5
        %v1246 = vmul.f32 %v357, 0.5
        %v1247 = vmul.f32 %v358, 0.5
        %v1248 = vmul.f32 %v359, 0.5
        %v1249 = vadd.f32 %v1169, %v1209
        %v1250 = vadd.f32 %v1170, %v1210
        %v1251 = vadd.f32 %v1171, %v1211
        %v1252 = vadd.f32 %v1172, %v1212
        %v1253 = vadd.f32 %v1173, %v1213
        %v1254 = vadd.f32 %v1174, %v1214
        %v1255 = vadd.f32 %v1175, %v1215
        %v1256 = vadd.f32 %v1176, %v1216
        %v1257 = vadd.f32 %v1177, %v1217
        %v1258 = vadd.f32 %v1178, %v1218
        %v1259 = vadd.f32 %v1179, %v1219
        %v1260 = vadd.f32 %v1180, %v1220
        %v1261 = vadd.f32 %v1181, %v1221
        %v1262 = vadd.f32 %v1182, %v1222
        %v1263 = vadd.f32 %v1183, %v1223
        %v1264 = vadd.f32 %v1184, %v1224
        %v1265 = vadd.f32 %v1185, %v1225
        %v1266 = vadd.f32 %v1186, %v1226
        %v1267 = vadd.f32 %v1187, %v1227
        %v1268 = vadd.f32 %v1188, %v1228
        %v1269 = vadd.f32 %v1189, %v1229
        %v1270 = vadd.f32 %v1190, %v1230
        %v1271 = vadd.f32 %v1191, %v1231
        %v1272 = vadd.f32 %v1192, %v1232
        %v1273 = vadd.f32 %v1193, %v1233
        %v1274 = vadd.f32 %v1194, %v1234
        %v1275 = vadd.f32 %v1195, %v1235
        %v1276 = vadd.f32 %v1196, %v1236
        %v1277 = vadd.f32 %v1197, %v1237
        %v1278 = vadd.f32 %v1198, %v1238
        %v1279 = vadd.f32 %v1199, %v1239
        %v1280 = vadd.f32 %v1200, %v1240
        %v1281 = vadd.f32 %v1201, %v1241
        %v1282 = vadd.f32 %v1202, %v1242
        %v1283 = vadd.f32 %v1203, %v1243
        %v1284 = vadd.f32 %v1204, %v1244
        %v1285 = vadd.f32 %v1205, %v1245
        %v1286 = vadd.f32 %v1206, %v1246
        %v1287 = vadd.f32 %v1207, %v1247
        %v1288 = vadd.f32 %v1208, %v1248
        %v1289 = vmul.f32 %v1249, %v1249
        %v1290 = vmul.f32 %v1250, %v1250
        %v1291 = vmul.f32 %v1251, %v1251
        %v1292 = vmul.f32 %v1252, %v1252
        %v1293 = vmul.f32 %v1253, %v1253
        %v1294 = vmul.f32 %v1254, %v1254
        %v1295 = vmul.f32 %v1255, %v1255
        %v1296 = vmul.f32 %v1256, %v1256
        %v1297 = vmul.f32 %v1257, %v1257
        %v1298 = vmul.f32 %v1258, %v1258
        %v1299 = vmul.f32 %v1259, %v1259
        %v1300 = vmul.f32 %v1260, %v1260
        %v1301 = vmul.f32 %v1261, %v1261
        %v1302 = vmul.f32 %v1262, %v1262
        %v1303 = vmul.f32 %v1263, %v1263
        %v1304 = vmul.f32 %v1264, %v1264
        %v1305 = vmul.f32 %v1265, %v1265
        %v1306 = vmul.f32 %v1266, %v1266
        %v1307 = vmul.f32 %v1267, %v1267
        %v1308 = vmul.f32 %v1268, %v1268
        %v1309 = vmul.f32 %v1269, %v1269
        %v1310 = vmul.f32 %v1270, %v1270
        %v1311 = vmul.f32 %v1271, %v1271
        %v1312 = vmul.f32 %v1272, %v1272
        %v1313 = vmul.f32 %v1273, %v1273
        %v1314 = vmul.f32 %v1274, %v1274
        %v1315 = vmul.f32 %v1275, %v1275
        %v1316 = vmul.f32 %v1276, %v1276
        %v1317 = vmul.f32 %v1277, %v1277
        %v1318 = vmul.f32 %v1278, %v1278
        %v1319 = vmul.f32 %v1279, %v1279
        %v1320 = vmul.f32 %v1280, %v1280
        %v1321 = vmul.f32 %v1281, %v1281
        %v1322 = vmul.f32 %v1282, %v1282
        %v1323 = vmul.f32 %v1283, %v1283
        %v1324 = vmul.f32 %v1284, %v1284
        %v1325 = vmul.f32 %v1285, %v1285
        %v1326 = vmul.f32 %v1286, %v1286
        %v1327 = vmul.f32 %v1287, %v1287
        %v1328 = vmul.f32 %v1288, %v1288
        %v1329 = vadd.f32 %v1289, %v1290
        %v1330 = vadd.f32 %v1329, %v1291
        %v1331 = vadd.f32 %v1330, %v1292
        %1332 = vadd.xlane.f32.xlu0 %v1331
        %v1333 = vpop.xlane.xlu0 %1332
        %v1334 = vadd.f32 %v1293, %v1294
        %v1335 = vadd.f32 %v1334, %v1295
        %v1336 = vadd.f32 %v1335, %v1296
        %1337 = vadd.xlane.f32.xlu0 %v1336
        %v1338 = vpop.xlane.xlu0 %1337
        %v1339 = vadd.f32 %v1297, %v1298
        %v1340 = vadd.f32 %v1339, %v1299
        %v1341 = vadd.f32 %v1340, %v1300
        %1342 = vadd.xlane.f32.xlu0 %v1341
        %v1343 = vpop.xlane.xlu0 %1342
        %v1344 = vadd.f32 %v1301, %v1302
        %v1345 = vadd.f32 %v1344, %v1303
        %v1346 = vadd.f32 %v1345, %v1304
        %1347 = vadd.xlane.f32.xlu0 %v1346
        %v1348 = vpop.xlane.xlu0 %1347
        %v1349 = vadd.f32 %v1305, %v1306
        %v1350 = vadd.f32 %v1349, %v1307
        %v1351 = vadd.f32 %v1350, %v1308
        %1352 = vadd.xlane.f32.xlu0 %v1351
        %v1353 = vpop.xlane.xlu0 %1352
        %v1354 = vadd.f32 %v1309, %v1310
        %v1355 = vadd.f32 %v1354, %v1311
        %v1356 = vadd.f32 %v1355, %v1312
        %1357 = vadd.xlane.f32.xlu0 %v1356
        %v1358 = vpop.xlane.xlu0 %1357
        %v1359 = vadd.f32 %v1313, %v1314
        %v1360 = vadd.f32 %v1359, %v1315
        %v1361 = vadd.f32 %v1360, %v1316
        %1362 = vadd.xlane.f32.xlu0 %v1361
        %v1363 = vpop.xlane.xlu0 %1362
        %v1364 = vadd.f32 %v1317, %v1318
        %v1365 = vadd.f32 %v1364, %v1319
        %v1366 = vadd.f32 %v1365, %v1320
        %1367 = vadd.xlane.f32.xlu0 %v1366
        %v1368 = vpop.xlane.xlu0 %1367
        %v1369 = vadd.f32 %v1321, %v1322
        %v1370 = vadd.f32 %v1369, %v1323
        %v1371 = vadd.f32 %v1370, %v1324
        %1372 = vadd.xlane.f32.xlu0 %v1371
        %v1373 = vpop.xlane.xlu0 %1372
        %v1374 = vadd.f32 %v1325, %v1326
        %v1375 = vadd.f32 %v1374, %v1327
        %v1376 = vadd.f32 %v1375, %v1328
        %1377 = vadd.xlane.f32.xlu0 %v1376
        %v1378 = vpop.xlane.xlu0 %1377
        %v1379 = vadd.f32 %v1333, 1e-12
        %v1380 = vadd.f32 %v1338, 1e-12
        %v1381 = vadd.f32 %v1343, 1e-12
        %v1382 = vadd.f32 %v1348, 1e-12
        %v1383 = vadd.f32 %v1353, 1e-12
        %v1384 = vadd.f32 %v1358, 1e-12
        %v1385 = vadd.f32 %v1363, 1e-12
        %v1386 = vadd.f32 %v1368, 1e-12
        %v1387 = vadd.f32 %v1373, 1e-12
        %v1388 = vadd.f32 %v1378, 1e-12
        %v1389 = vrsqrt.pop %v1379
        %v1390 = vmul.f32 %v1389, %v1379
        %v1391 = vmul.f32 %v1390, %v1389
        %v1392 = vmul.f32 0.5, %v1391
        %v1393 = vsub.f32 1.5, %v1392
        %v1394 = vmul.f32 %v1389, %v1393
        %vm1395 = vweird.f32 %v1379
        %vm1396 = vweird.f32 %v1389
        %vm1397 = vmor %vm1395, %vm1396
        %v1398 = vsel %vm1397, %v1389, %v1394
        %v1399 = vrsqrt.pop %v1380
        %v1400 = vmul.f32 %v1399, %v1380
        %v1401 = vmul.f32 %v1400, %v1399
        %v1402 = vmul.f32 0.5, %v1401
        %v1403 = vsub.f32 1.5, %v1402
        %v1404 = vmul.f32 %v1399, %v1403
        %vm1405 = vweird.f32 %v1380
        %vm1406 = vweird.f32 %v1399
        %vm1407 = vmor %vm1405, %vm1406
        %v1408 = vsel %vm1407, %v1399, %v1404
        %v1409 = vrsqrt.pop %v1381
        %v1410 = vmul.f32 %v1409, %v1381
        %v1411 = vmul.f32 %v1410, %v1409
        %v1412 = vmul.f32 0.5, %v1411
        %v1413 = vsub.f32 1.5, %v1412
        %v1414 = vmul.f32 %v1409, %v1413
        %vm1415 = vweird.f32 %v1381
        %vm1416 = vweird.f32 %v1409
        %vm1417 = vmor %vm1415, %vm1416
        %v1418 = vsel %vm1417, %v1409, %v1414
        %v1419 = vrsqrt.pop %v1382
        %v1420 = vmul.f32 %v1419, %v1382
        %v1421 = vmul.f32 %v1420, %v1419
        %v1422 = vmul.f32 0.5, %v1421
        %v1423 = vsub.f32 1.5, %v1422
        %v1424 = vmul.f32 %v1419, %v1423
        %vm1425 = vweird.f32 %v1382
        %vm1426 = vweird.f32 %v1419
        %vm1427 = vmor %vm1425, %vm1426
        %v1428 = vsel %vm1427, %v1419, %v1424
        %v1429 = vrsqrt.pop %v1383
        %v1430 = vmul.f32 %v1429, %v1383
        %v1431 = vmul.f32 %v1430, %v1429
        %v1432 = vmul.f32 0.5, %v1431
        %v1433 = vsub.f32 1.5, %v1432
        %v1434 = vmul.f32 %v1429, %v1433
        %vm1435 = vweird.f32 %v1383
        %vm1436 = vweird.f32 %v1429
        %vm1437 = vmor %vm1435, %vm1436
        %v1438 = vsel %vm1437, %v1429, %v1434
        %v1439 = vrsqrt.pop %v1384
        %v1440 = vmul.f32 %v1439, %v1384
        %v1441 = vmul.f32 %v1440, %v1439
        %v1442 = vmul.f32 0.5, %v1441
        %v1443 = vsub.f32 1.5, %v1442
        %v1444 = vmul.f32 %v1439, %v1443
        %vm1445 = vweird.f32 %v1384
        %vm1446 = vweird.f32 %v1439
        %vm1447 = vmor %vm1445, %vm1446
        %v1448 = vsel %vm1447, %v1439, %v1444
        %v1449 = vrsqrt.pop %v1385
        %v1450 = vmul.f32 %v1449, %v1385
        %v1451 = vmul.f32 %v1450, %v1449
        %v1452 = vmul.f32 0.5, %v1451
        %v1453 = vsub.f32 1.5, %v1452
        %v1454 = vmul.f32 %v1449, %v1453
        %vm1455 = vweird.f32 %v1385
        %vm1456 = vweird.f32 %v1449
        %vm1457 = vmor %vm1455, %vm1456
        %v1458 = vsel %vm1457, %v1449, %v1454
        %v1459 = vrsqrt.pop %v1386
        %v1460 = vmul.f32 %v1459, %v1386
        %v1461 = vmul.f32 %v1460, %v1459
        %v1462 = vmul.f32 0.5, %v1461
        %v1463 = vsub.f32 1.5, %v1462
        %v1464 = vmul.f32 %v1459, %v1463
        %vm1465 = vweird.f32 %v1386
        %vm1466 = vweird.f32 %v1459
        %vm1467 = vmor %vm1465, %vm1466
        %v1468 = vsel %vm1467, %v1459, %v1464
        %v1469 = vrsqrt.pop %v1387
        %v1470 = vmul.f32 %v1469, %v1387
        %v1471 = vmul.f32 %v1470, %v1469
        %v1472 = vmul.f32 0.5, %v1471
        %v1473 = vsub.f32 1.5, %v1472
        %v1474 = vmul.f32 %v1469, %v1473
        %vm1475 = vweird.f32 %v1387
        %vm1476 = vweird.f32 %v1469
        %vm1477 = vmor %vm1475, %vm1476
        %v1478 = vsel %vm1477, %v1469, %v1474
        %v1479 = vrsqrt.pop %v1388
        %v1480 = vmul.f32 %v1479, %v1388
        %v1481 = vmul.f32 %v1480, %v1479
        %v1482 = vmul.f32 0.5, %v1481
        %v1483 = vsub.f32 1.5, %v1482
        %v1484 = vmul.f32 %v1479, %v1483
        %vm1485 = vweird.f32 %v1388
        %vm1486 = vweird.f32 %v1479
        %vm1487 = vmor %vm1485, %vm1486
        %v1488 = vsel %vm1487, %v1479, %v1484
        %v1489 = vld [vmem:[%s5] sm:$0xff]
        %v1490 = vld [vmem:[%s5 + $0x8] sm:$0xff]
        %v1491 = vld [vmem:[%s5 + $0x10] sm:$0xff]
        %v1492 = vld [vmem:[%s5 + $0x18] sm:$0xff]
        %v1493 = vld [vmem:[%s5 + $0x20] sm:$0xff]
        %v1494 = vld [vmem:[%s5 + $0x28] sm:$0xff]
        %v1495 = vld [vmem:[%s5 + $0x30] sm:$0xff]
        %v1496 = vld [vmem:[%s5 + $0x38] sm:$0xff]
        %v1497 = vld [vmem:[%s5 + $0x40] sm:$0xff]
        %v1498 = vld [vmem:[%s5 + $0x48] sm:$0xff]
        %v1499 = vmul.f32 %v1398, %v1489
        %v1500 = vmul.f32 %v1408, %v1490
        %v1501 = vmul.f32 %v1418, %v1491
        %v1502 = vmul.f32 %v1428, %v1492
        %v1503 = vmul.f32 %v1438, %v1493
        %v1504 = vmul.f32 %v1448, %v1494
        %v1505 = vmul.f32 %v1458, %v1495
        %v1506 = vmul.f32 %v1468, %v1496
        %v1507 = vmul.f32 %v1478, %v1497
        %v1508 = vmul.f32 %v1488, %v1498
        %1510 = vset.pattern.permute.xlu0 0
        %1511 = vperm.xlu0 %1510, %v1499
        %v1512 = vpop.permute.xlu0 %1511
        %1515 = vset.pattern.permute.xlu0 0
        %1516 = vperm.xlu0 %1515, %v1500
        %v1517 = vpop.permute.xlu0 %1516
        %1520 = vset.pattern.permute.xlu0 0
        %1521 = vperm.xlu0 %1520, %v1501
        %v1522 = vpop.permute.xlu0 %1521
        %1525 = vset.pattern.permute.xlu0 0
        %1526 = vperm.xlu0 %1525, %v1502
        %v1527 = vpop.permute.xlu0 %1526
        %1530 = vset.pattern.permute.xlu0 0
        %1531 = vperm.xlu0 %1530, %v1503
        %v1532 = vpop.permute.xlu0 %1531
        %1535 = vset.pattern.permute.xlu0 0
        %1536 = vperm.xlu0 %1535, %v1504
        %v1537 = vpop.permute.xlu0 %1536
        %1540 = vset.pattern.permute.xlu0 0
        %1541 = vperm.xlu0 %1540, %v1505
        %v1542 = vpop.permute.xlu0 %1541
        %1545 = vset.pattern.permute.xlu0 0
        %1546 = vperm.xlu0 %1545, %v1506
        %v1547 = vpop.permute.xlu0 %1546
        %1550 = vset.pattern.permute.xlu0 0
        %1551 = vperm.xlu0 %1550, %v1507
        %v1552 = vpop.permute.xlu0 %1551
        %1555 = vset.pattern.permute.xlu0 0
        %1556 = vperm.xlu0 %1555, %v1508
        %v1557 = vpop.permute.xlu0 %1556
        %v1559 = vmul.f32 %v1249, %v1512
        %v1560 = vmul.f32 %v1250, %v1512
        %v1561 = vmul.f32 %v1251, %v1512
        %v1562 = vmul.f32 %v1252, %v1512
        %v1563 = vmul.f32 %v1253, %v1517
        %v1564 = vmul.f32 %v1254, %v1517
        %v1565 = vmul.f32 %v1255, %v1517
        %v1566 = vmul.f32 %v1256, %v1517
        %v1567 = vmul.f32 %v1257, %v1522
        %v1568 = vmul.f32 %v1258, %v1522
        %v1569 = vmul.f32 %v1259, %v1522
        %v1570 = vmul.f32 %v1260, %v1522
        %v1571 = vmul.f32 %v1261, %v1527
        %v1572 = vmul.f32 %v1262, %v1527
        %v1573 = vmul.f32 %v1263, %v1527
        %v1574 = vmul.f32 %v1264, %v1527
        %v1575 = vmul.f32 %v1265, %v1532
        %v1576 = vmul.f32 %v1266, %v1532
        %v1577 = vmul.f32 %v1267, %v1532
        %v1578 = vmul.f32 %v1268, %v1532
        %v1579 = vmul.f32 %v1269, %v1537
        %v1580 = vmul.f32 %v1270, %v1537
        %v1581 = vmul.f32 %v1271, %v1537
        %v1582 = vmul.f32 %v1272, %v1537
        %v1583 = vmul.f32 %v1273, %v1542
        %v1584 = vmul.f32 %v1274, %v1542
        %v1585 = vmul.f32 %v1275, %v1542
        %v1586 = vmul.f32 %v1276, %v1542
        %v1587 = vmul.f32 %v1277, %v1547
        %v1588 = vmul.f32 %v1278, %v1547
        %v1589 = vmul.f32 %v1279, %v1547
        %v1590 = vmul.f32 %v1280, %v1547
        %v1591 = vmul.f32 %v1281, %v1552
        %v1592 = vmul.f32 %v1282, %v1552
        %v1593 = vmul.f32 %v1283, %v1552
        %v1594 = vmul.f32 %v1284, %v1552
        %v1595 = vmul.f32 %v1285, %v1557
        %v1596 = vmul.f32 %v1286, %v1557
        %v1597 = vmul.f32 %v1287, %v1557
        %v1598 = vmul.f32 %v1288, %v1557
        %v1599 = vadd.f32 %v1559, %v1563
        %v1600 = vadd.f32 %v1560, %v1564
        %v1601 = vadd.f32 %v1561, %v1565
        %v1602 = vadd.f32 %v1562, %v1566
        %v1603 = vadd.f32 %v1599, %v1567
        %v1604 = vadd.f32 %v1600, %v1568
        %v1605 = vadd.f32 %v1601, %v1569
        %v1606 = vadd.f32 %v1602, %v1570
        %v1607 = vadd.f32 %v1603, %v1571
        %v1608 = vadd.f32 %v1604, %v1572
        %v1609 = vadd.f32 %v1605, %v1573
        %v1610 = vadd.f32 %v1606, %v1574
        %v1611 = vadd.f32 %v1607, %v1575
        %v1612 = vadd.f32 %v1608, %v1576
        %v1613 = vadd.f32 %v1609, %v1577
        %v1614 = vadd.f32 %v1610, %v1578
        %v1615 = vadd.f32 %v1611, %v1579
        %v1616 = vadd.f32 %v1612, %v1580
        %v1617 = vadd.f32 %v1613, %v1581
        %v1618 = vadd.f32 %v1614, %v1582
        %v1619 = vadd.f32 %v1615, %v1583
        %v1620 = vadd.f32 %v1616, %v1584
        %v1621 = vadd.f32 %v1617, %v1585
        %v1622 = vadd.f32 %v1618, %v1586
        %v1623 = vadd.f32 %v1619, %v1587
        %v1624 = vadd.f32 %v1620, %v1588
        %v1625 = vadd.f32 %v1621, %v1589
        %v1626 = vadd.f32 %v1622, %v1590
        %v1627 = vadd.f32 %v1623, %v1591
        %v1628 = vadd.f32 %v1624, %v1592
        %v1629 = vadd.f32 %v1625, %v1593
        %v1630 = vadd.f32 %v1626, %v1594
        %v1631 = vadd.f32 %v1627, %v1595
        %v1632 = vadd.f32 %v1628, %v1596
        %v1633 = vadd.f32 %v1629, %v1597
        %v1634 = vadd.f32 %v1630, %v1598
        %v1635 = vmul.f32 %v1631, 0.1
        %v1636 = vmul.f32 %v1632, 0.1
        %v1637 = vmul.f32 %v1633, 0.1
        %v1638 = vmul.f32 %v1634, 0.1
        %1639 = vst [vmem:[%s305] sm:$0xff] %v1635
        %1640 = vst [vmem:[%s305 + $0x8] sm:$0xff] %v1636
        %1641 = vst [vmem:[%s305 + $0x10] sm:$0xff] %v1637
        %1642 = vst [vmem:[%s305 + $0x18] sm:$0xff] %v1638
        %v1643 = vld [vmem:[%s6] sm:$0xff]
        %v1644 = vld [vmem:[%s6 + $0x8] sm:$0xff]
        %v1645 = vld [vmem:[%s6 + $0x10] sm:$0xff]
        %v1646 = vld [vmem:[%s6 + $0x18] sm:$0xff]
        %v1647 = vld [vmem:[%s6 + $0x20] sm:$0xff]
        %v1648 = vld [vmem:[%s6 + $0x28] sm:$0xff]
        %v1649 = vld [vmem:[%s6 + $0x30] sm:$0xff]
        %v1650 = vld [vmem:[%s6 + $0x38] sm:$0xff]
        %v1651 = vld [vmem:[%s6 + $0x40] sm:$0xff]
        %v1652 = vld [vmem:[%s6 + $0x48] sm:$0xff]
        %v1653 = vld [vmem:[%s6 + $0x50] sm:$0xff]
        %v1654 = vld [vmem:[%s6 + $0x58] sm:$0xff]
        %v1655 = vld [vmem:[%s6 + $0x60] sm:$0xff]
        %v1656 = vld [vmem:[%s6 + $0x68] sm:$0xff]
        %v1657 = vld [vmem:[%s6 + $0x70] sm:$0xff]
        %v1658 = vld [vmem:[%s6 + $0x78] sm:$0xff]
        %v1659 = vld [vmem:[%s6 + $0x80] sm:$0xff]
        %v1660 = vld [vmem:[%s6 + $0x88] sm:$0xff]
        %v1661 = vld [vmem:[%s6 + $0x90] sm:$0xff]
        %v1662 = vld [vmem:[%s6 + $0x98] sm:$0xff]
        %v1663 = vld [vmem:[%s6 + $0xa0] sm:$0xff]
        %v1664 = vld [vmem:[%s6 + $0xa8] sm:$0xff]
        %v1665 = vld [vmem:[%s6 + $0xb0] sm:$0xff]
        %v1666 = vld [vmem:[%s6 + $0xb8] sm:$0xff]
        %v1667 = vld [vmem:[%s6 + $0xc0] sm:$0xff]
        %v1668 = vld [vmem:[%s6 + $0xc8] sm:$0xff]
        %v1669 = vld [vmem:[%s6 + $0xd0] sm:$0xff]
        %v1670 = vld [vmem:[%s6 + $0xd8] sm:$0xff]
        %v1671 = vld [vmem:[%s6 + $0xe0] sm:$0xff]
        %v1672 = vld [vmem:[%s6 + $0xe8] sm:$0xff]
        %v1673 = vld [vmem:[%s6 + $0xf0] sm:$0xff]
        %v1674 = vld [vmem:[%s6 + $0xf8] sm:$0xff]
        %v1675 = vld [vmem:[%s6 + $0x100] sm:$0xff]
        %v1676 = vld [vmem:[%s6 + $0x108] sm:$0xff]
        %v1677 = vld [vmem:[%s6 + $0x110] sm:$0xff]
        %v1678 = vld [vmem:[%s6 + $0x118] sm:$0xff]
        %v1679 = vld [vmem:[%s6 + $0x120] sm:$0xff]
        %v1680 = vld [vmem:[%s6 + $0x128] sm:$0xff]
        %v1681 = vld [vmem:[%s6 + $0x130] sm:$0xff]
        %v1682 = vld [vmem:[%s6 + $0x138] sm:$0xff]
        %v1683 = vld [vmem:[%s6 + $0x140] sm:$0xff]
        %v1684 = vld [vmem:[%s6 + $0x148] sm:$0xff]
        %v1685 = vld [vmem:[%s6 + $0x150] sm:$0xff]
        %v1686 = vld [vmem:[%s6 + $0x158] sm:$0xff]
        %v1687 = vld [vmem:[%s6 + $0x160] sm:$0xff]
        %v1688 = vld [vmem:[%s6 + $0x168] sm:$0xff]
        %v1689 = vld [vmem:[%s6 + $0x170] sm:$0xff]
        %v1690 = vld [vmem:[%s6 + $0x178] sm:$0xff]
        %v1691 = vld [vmem:[%s6 + $0x180] sm:$0xff]
        %v1692 = vld [vmem:[%s6 + $0x188] sm:$0xff]
        %v1693 = vld [vmem:[%s6 + $0x190] sm:$0xff]
        %v1694 = vld [vmem:[%s6 + $0x198] sm:$0xff]
        %v1695 = vld [vmem:[%s6 + $0x1a0] sm:$0xff]
        %v1696 = vld [vmem:[%s6 + $0x1a8] sm:$0xff]
        %v1697 = vld [vmem:[%s6 + $0x1b0] sm:$0xff]
        %v1698 = vld [vmem:[%s6 + $0x1b8] sm:$0xff]
        %v1699 = vld [vmem:[%s6 + $0x1c0] sm:$0xff]
        %v1700 = vld [vmem:[%s6 + $0x1c8] sm:$0xff]
        %v1701 = vld [vmem:[%s6 + $0x1d0] sm:$0xff]
        %v1702 = vld [vmem:[%s6 + $0x1d8] sm:$0xff]
        %v1703 = vld [vmem:[%s6 + $0x1e0] sm:$0xff]
        %v1704 = vld [vmem:[%s6 + $0x1e8] sm:$0xff]
        %v1705 = vld [vmem:[%s6 + $0x1f0] sm:$0xff]
        %v1706 = vld [vmem:[%s6 + $0x1f8] sm:$0xff]
        %1707 = vmatpush.msra.mxu0 %v1658
        %1708 = vmatpush.msra.mxu0 %v1657
        %1709 = vmatpush.msra.mxu0 %v1656
        %1710 = vmatpush.msra.mxu0 %v1655
        %1711 = vmatpush.msra.mxu0 %v1654
        %1712 = vmatpush.msra.mxu0 %v1653
        %1713 = vmatpush.msra.mxu0 %v1652
        %1714 = vmatpush.msra.mxu0 %v1651
        %1715 = vmatpush.msra.mxu0 %v1650
        %1716 = vmatpush.msra.mxu0 %v1649
        %1717 = vmatpush.msra.mxu0 %v1648
        %1718 = vmatpush.msra.mxu0 %v1647
        %1719 = vmatpush.msra.mxu0 %v1646
        %1720 = vmatpush.msra.mxu0 %v1645
        %1721 = vmatpush.msra.mxu0 %v1644
        %1722 = vmatpush.msra.mxu0 %v1643
        %1723 = vmatmul.f32.gmra.mxu0 %v1631
        %v1724 = vpop.f32.mrf.mxu0
        %v1725 = vadd.f32 0.0, %v1724
        %1726 = vdwg.mxu0
        %1727 = vmatpush.msra.mxu0 %v1674
        %1728 = vmatpush.msra.mxu0 %v1673
        %1729 = vmatpush.msra.mxu0 %v1672
        %1730 = vmatpush.msra.mxu0 %v1671
        %1731 = vmatpush.msra.mxu0 %v1670
        %1732 = vmatpush.msra.mxu0 %v1669
        %1733 = vmatpush.msra.mxu0 %v1668
        %1734 = vmatpush.msra.mxu0 %v1667
        %1735 = vmatpush.msra.mxu0 %v1666
        %1736 = vmatpush.msra.mxu0 %v1665
        %1737 = vmatpush.msra.mxu0 %v1664
        %1738 = vmatpush.msra.mxu0 %v1663
        %1739 = vmatpush.msra.mxu0 %v1662
        %1740 = vmatpush.msra.mxu0 %v1661
        %1741 = vmatpush.msra.mxu0 %v1660
        %1742 = vmatpush.msra.mxu0 %v1659
        %1743 = vmatmul.f32.gmra.mxu0 %v1632
        %v1744 = vpop.f32.mrf.mxu0
        %v1745 = vadd.f32 %v1725, %v1744
        %1746 = vdwg.mxu0
        %1747 = vmatpush.msra.mxu0 %v1690
        %1748 = vmatpush.msra.mxu0 %v1689
        %1749 = vmatpush.msra.mxu0 %v1688
        %1750 = vmatpush.msra.mxu0 %v1687
        %1751 = vmatpush.msra.mxu0 %v1686
        %1752 = vmatpush.msra.mxu0 %v1685
        %1753 = vmatpush.msra.mxu0 %v1684
        %1754 = vmatpush.msra.mxu0 %v1683
        %1755 = vmatpush.msra.mxu0 %v1682
        %1756 = vmatpush.msra.mxu0 %v1681
        %1757 = vmatpush.msra.mxu0 %v1680
        %1758 = vmatpush.msra.mxu0 %v1679
        %1759 = vmatpush.msra.mxu0 %v1678
        %1760 = vmatpush.msra.mxu0 %v1677
        %1761 = vmatpush.msra.mxu0 %v1676
        %1762 = vmatpush.msra.mxu0 %v1675
        %1763 = vmatmul.f32.gmra.mxu0 %v1633
        %v1764 = vpop.f32.mrf.mxu0
        %v1765 = vadd.f32 %v1745, %v1764
        %1766 = vdwg.mxu0
        %1767 = vmatpush.msra.mxu0 %v1706
        %1768 = vmatpush.msra.mxu0 %v1705
        %1769 = vmatpush.msra.mxu0 %v1704
        %1770 = vmatpush.msra.mxu0 %v1703
        %1771 = vmatpush.msra.mxu0 %v1702
        %1772 = vmatpush.msra.mxu0 %v1701
        %1773 = vmatpush.msra.mxu0 %v1700
        %1774 = vmatpush.msra.mxu0 %v1699
        %1775 = vmatpush.msra.mxu0 %v1698
        %1776 = vmatpush.msra.mxu0 %v1697
        %1777 = vmatpush.msra.mxu0 %v1696
        %1778 = vmatpush.msra.mxu0 %v1695
        %1779 = vmatpush.msra.mxu0 %v1694
        %1780 = vmatpush.msra.mxu0 %v1693
        %1781 = vmatpush.msra.mxu0 %v1692
        %1782 = vmatpush.msra.mxu0 %v1691
        %1783 = vmatmul.f32.gmra.mxu0 %v1634
        %v1784 = vpop.f32.mrf.mxu0
        %v1785 = vadd.f32 %v1765, %v1784
        %1786 = vdwg.mxu0
        %v1787 = vmul.f32 %v1785, 100.0
        %vm1788 = vcmask 130048
        %1789 = vst.msk [vmem:[%s312] sm:$0xff] %vm1788, %v1787
        %s1790 = sand.u32 %s186, 1
        %s1791 = scalar_lea.sflag [#allocation3], %s1790
        %s1792 = sand.u32 %s186, 1
        %s1793 = smul.addr %s1792, 32
        %s1794 = scalar_lea.vmem [#allocation2], %s1793
        %s1795 = sand.u32 %s212, 1
        %s1796 = scalar_lea.sflag [#allocation5], %s1795
        %s1797 = sand.u32 %s212, 1
        %s1798 = smul.addr %s1797, 8
        %s1799 = scalar_lea.vmem [#allocation4], %s1798
        // Predicated region
        $region49: #{clip_adapter_seg_forward.1} parent=47 // pred_check
          %p1800 = pneg %p196
        $region50: #{clip_adapter_seg_forward.1} parent=47 // pred_check_branch
          %1802 = sbr.rel (%p1800) target = $region52
        $region51: #{clip_adapter_seg_forward.1} parent=47 // pred_region
          %1804 = vsyncadd %s1791, 0
          %s1805 = smul.addr %s26, 4
          %s1806 = smul.addr %s1805, 8
          %s1807 = scalar_lea.hbm %s7, %s1806
          %s1809 = sshll.u32 %s1794, 4
          %s1810 = int_to_ptr.vmem [resolvable:$true] %s1809
          %s1811 = sshll.u32 %s1807, 4
          %s1812 = int_to_ptr.hbm [resolvable:$true] %s1811
          %1814 = dma.vmem_to_hbm [thread:$0]  %s1810, 512, %s1812, %s1791
        $region52: #{clip_adapter_seg_forward.1} parent=47 // pred_fallthru
          _
        // Predicated region
        $region53: #{clip_adapter_seg_forward.1} parent=47 // pred_check
          %p1815 = pneg %p222
        $region54: #{clip_adapter_seg_forward.1} parent=47 // pred_check_branch
          %1817 = sbr.rel (%p1815) target = $region56
        $region55: #{clip_adapter_seg_forward.1} parent=47 // pred_region
          %1819 = vsyncadd %s1796, 0
          %s1820 = smul.addr %s26, 8
          %s1821 = scalar_lea.hbm %s8, %s1820
          %s1823 = sshll.u32 %s1799, 4
          %s1824 = int_to_ptr.vmem [resolvable:$true] %s1823
          %s1825 = sshll.u32 %s1821, 4
          %s1826 = int_to_ptr.hbm [resolvable:$true] %s1825
          %1828 = dma.vmem_to_hbm [thread:$0]  %s1824, 128, %s1826, %s1796
        $region56: #{clip_adapter_seg_forward.1} parent=47 // pred_fallthru
          _
      $region48: #{clip_adapter_seg_forward.1} parent=5 // pred_fallthru
        _
      %p1829 = scmp.le.s32.totalorder 2, %s21
      // Predicated region
      $region57: #{clip_adapter_seg_forward.1} parent=5 // pred_check
        %p1830 = pneg %p1829
      $region58: #{clip_adapter_seg_forward.1} parent=5 // pred_check_branch
        %1832 = sbr.rel (%p1830) target = $region60
      $region59: #{clip_adapter_seg_forward.1} parent=5 // pred_region
        %s1833 = ssub.s32 %s21, 2
        // Predicated region
        $region61: #{clip_adapter_seg_forward.1} parent=59 // pred_check
          %p1834 = pneg %p202
        $region62: #{clip_adapter_seg_forward.1} parent=59 // pred_check_branch
          %1836 = sbr.rel (%p1834) target = $region64
        $region63: #{clip_adapter_seg_forward.1} parent=59 // pred_region
          %s1837 = sand.u32 %s187, 1
          %s1838 = scalar_lea.sflag [#allocation3], %s1837
          %s1839 = sand.u32 %s187, 1
          %s1840 = smul.addr %s1839, 32
          %s1841 = scalar_lea.vmem [#allocation2], %s1840
          %1843 = dma.done %s1838, 512
        $region64: #{clip_adapter_seg_forward.1} parent=59 // pred_fallthru
          _
        // Predicated region
        $region65: #{clip_adapter_seg_forward.1} parent=59 // pred_check
          %p1844 = pneg %p228
        $region66: #{clip_adapter_seg_forward.1} parent=59 // pred_check_branch
          %1846 = sbr.rel (%p1844) target = $region68
        $region67: #{clip_adapter_seg_forward.1} parent=59 // pred_region
          %s1847 = sand.u32 %s213, 1
          %s1848 = scalar_lea.sflag [#allocation5], %s1847
          %s1849 = sand.u32 %s213, 1
          %s1850 = smul.addr %s1849, 8
          %s1851 = scalar_lea.vmem [#allocation4], %s1850
          %1853 = dma.done %s1848, 128
        $region68: #{clip_adapter_seg_forward.1} parent=59 // pred_fallthru
          _
      $region60: #{clip_adapter_seg_forward.1} parent=5 // pred_fallthru
        _
    $region6: #{clip_adapter_seg_forward.1} parent=1 // loop_footer
      %s25 = sadd.s32 1, %s21
    $region7: #{clip_adapter_seg_forward.1} parent=1 // loop_footer_branch
      %20 = sbr.rel target = $region3
    $region8: #{clip_adapter_seg_forward.1} parent=1 // loop_exit
      _
    %1854 = vsyncpa [#allocation3], 1
    %s1855 = scalar_lea.sflag [#allocation3], 1
    %1856 = vsyncpa %s1855, 1
    %1857 = vsyncpa [#allocation5], 1
    %s1858 = scalar_lea.sflag [#allocation5], 1
    %1859 = vsyncpa %s1858, 1

</llo_original>
